<compile_context>
chip_gen: v7x
topology: tpu7x:2x2x1
jax: 0.10.0
libtpu: 0.0.40
codegen_flags: <defaults>
</compile_context>

<pallas_src>
import functools
import math

import jax
import jax.numpy as jnp
from jax.experimental import pallas as pl
from jax.experimental.pallas import tpu as pltpu


# ----------------------------------------------------------------------------
# Pallas kernel: whole M3TN forward for one batch tile.
# ----------------------------------------------------------------------------
def m3tn_kernel(
    x_ref,
    # fused first layer: [gating-l1 | expert-l1s]  (in, 128 + E*h)
    w0, b0,
    # remaining gating tower; wg4x has each expert column repeated output_dim x
    wg2, bg2, wg3, bg3, wg4x, bg4x,
    # experts layer 2 block-diagonal (E*h, E*out) + segment-sum matrix
    we2, be2, sfull,
    # fused control|uplift head chain (wh1 is expert-tiled)
    wh1, bh1, wh2, bh2, wh3, bh3, wh4, bh4, whf, bhf,
    # single lane-dense-ish output: (B, 8) = [c_logit,c_tau,t_logit,u_tau | sigmoid(...)]
    out_ref,
    *, gate_width, out_scale,
):
    mm_dtype = w0.dtype                              # bf16 matmul operands

    def lin(h, w_ref, b_ref):
        return (
            jnp.dot(h.astype(mm_dtype), w_ref[...],
                    preferred_element_type=jnp.float32)
            + b_ref[...]
        )

    relu = lambda v: jnp.maximum(v, 0.0)
    leaky = lambda v: jnp.maximum(v, 0.01 * v)       # nn.LeakyReLU default slope
    act = relu                                       # act_type == 'relu'

    x = x_ref[...]

    # ---- fused first layer: gating-l1 and all expert-l1s share x + ReLU ----
    h0 = relu(lin(x, w0, b0))                        # (B, 128 + E*h)
    g = h0[:, :gate_width]                           # (B, 128)
    h_all = h0[:, gate_width:]                       # (B, E*h)

    # ---- gating tower ------------------------------------------------------
    g = leaky(lin(g, wg2, bg2))
    g = leaky(lin(g, wg3, bg3))
    g4 = lin(g, wg4x, bg4x)                          # (B, E*out) lane-expanded logits
    g4 = g4 - jnp.max(g4, axis=-1, keepdims=True)
    ge = jnp.exp(g4)
    # softmax over the expanded lanes == gate / output_dim -> rescale by out_scale
    gate = ge * (out_scale * pl.reciprocal(
        jnp.sum(ge, axis=-1, keepdims=True), approx=True))      # (B, E*out)

    # ---- experts layer 2 + slab-wide per-expert softmax --------------------
    o = lin(h_all, we2, be2)                         # (B, E*out), block-diag GEMM
    o = o - jnp.max(o, axis=-1, keepdims=True)       # row-global max is a valid shift
    eo = jnp.exp(o)                                  # one EUP pass for all experts
    denom = jnp.dot(eo.astype(mm_dtype), sfull[...],
                    preferred_element_type=jnp.float32)  # per-lane segment sums
    # gate-weighted per-expert softmax, still lane-expanded (B, E*out)
    ew = eo * gate * pl.reciprocal(denom, approx=True)

    # ---- fused control | uplift heads --------------------------------------
    # wh1 is tiled over experts so this GEMM also performs the sum over experts.
    t = act(lin(ew, wh1, bh1))                       # (B, 2h)   [c | u]
    t = act(lin(t, wh2, bh2))                        # (B, 2h)
    t = act(lin(t, wh3, bh3))                        # (B, h)
    t = act(lin(t, wh4, bh4))                        # (B, h/2)
    f = lin(t, whf, bhf)                             # (B, 4): c_logit,c_tau,t_logit,u_tau

    sig = pl.reciprocal(1.0 + jnp.exp(-f), approx=True)   # sigmoid via EUP recip
    out_ref[...] = jnp.concatenate([f, sig], axis=-1)     # (B, 8), single store


# ----------------------------------------------------------------------------
# Parameter initialization (deterministic, PyTorch-Linear-style uniform init).
# Kept in the original per-layer layout; fused/packed separately below.
# ----------------------------------------------------------------------------
def init_params(key, input_dim, h_dim, output_dim, num_experts):
    n_linears = 4 + 2 * num_experts + 6 + 6
    keys = iter(jax.random.split(key, 2 * n_linears))

    def lin(i, o):
        bound = 1.0 / math.sqrt(i)
        w = jax.random.uniform(next(keys), (i, o), jnp.float32, -bound, bound)
        b = jax.random.uniform(next(keys), (1, o), jnp.float32, -bound, bound)
        return w, b

    # gating
    wg1, bg1 = lin(input_dim, 128)
    wg2, bg2 = lin(128, 256)
    wg3, bg3 = lin(256, 128)
    wg4, bg4 = lin(128, num_experts)

    # experts
    e1 = [lin(input_dim, h_dim) for _ in range(num_experts)]
    e2 = [lin(h_dim, output_dim) for _ in range(num_experts)]
    we1 = jnp.stack([w for w, _ in e1])        # (E, input_dim, h_dim)
    be1 = jnp.stack([b for _, b in e1])        # (E, 1, h_dim)
    we2 = jnp.stack([w for w, _ in e2])        # (E, h_dim, output_dim)
    be2 = jnp.stack([b for _, b in e2])        # (E, 1, output_dim)

    # control head (is_self = False)
    wc1, bc1 = lin(output_dim, h_dim)
    wc2, bc2 = lin(h_dim, h_dim)
    wc3, bc3 = lin(h_dim, h_dim // 2)
    wc4, bc4 = lin(h_dim // 2, h_dim // 4)
    wcl, bcl = lin(h_dim // 4, 1)
    wct, bct = lin(h_dim // 4, 1)

    # uplift head
    wu1, bu1 = lin(output_dim, h_dim)
    wu2, bu2 = lin(h_dim, h_dim)
    wu3, bu3 = lin(h_dim, h_dim // 2)
    wu4, bu4 = lin(h_dim // 2, h_dim // 4)
    wtl, btl = lin(h_dim // 4, 1)
    wut, but = lin(h_dim // 4, 1)

    return (
        wg1, bg1, wg2, bg2, wg3, bg3, wg4, bg4,
        we1, be1, we2, be2,
        wc1, bc1, wc2, bc2, wc3, bc3, wc4, bc4, wcl, bcl, wct, bct,
        wu1, bu1, wu2, bu2, wu3, bu3, wu4, bu4, wtl, btl, wut, but,
    )


def _block_diag(*blocks):
    rows = sum(b.shape[0] for b in blocks)
    cols = sum(b.shape[1] for b in blocks)
    out = jnp.zeros((rows, cols), blocks[0].dtype)
    r = c = 0
    for b in blocks:
        out = out.at[r:r + b.shape[0], c:c + b.shape[1]].set(b)
        r += b.shape[0]
        c += b.shape[1]
    return out


# ----------------------------------------------------------------------------
# Host-side packing (call ONCE at model-load time, not per forward).
# Weights -> bf16 matmul operands, biases stay f32.
# ----------------------------------------------------------------------------
def fuse_params(params, matmul_dtype=jnp.bfloat16):
    (wg1, bg1, wg2, bg2, wg3, bg3, wg4, bg4,
     we1, be1, we2, be2,
     wc1, bc1, wc2, bc2, wc3, bc3, wc4, bc4, wcl, bcl, wct, bct,
     wu1, bu1, wu2, bu2, wu3, bu3, wu4, bu4, wtl, btl, wut, but) = params

    E = we1.shape[0]
    out = we2.shape[2]
    gate_width = wg1.shape[1]                  # 128

    # fused first layer: [gating-l1 | expert-l1s] along N
    we1f = jnp.concatenate([we1[e] for e in range(E)], axis=1)   # (in, E*h)
    be1f = jnp.concatenate([be1[e] for e in range(E)], axis=1)   # (1, E*h)
    w0 = jnp.concatenate([wg1, we1f], axis=1)                    # (in, 128+E*h)
    b0 = jnp.concatenate([bg1, be1f], axis=1)

    # gating final layer: repeat each expert column output_dim times so the
    # kernel gets lane-expanded gate logits directly from the GEMM.
    wg4x = jnp.repeat(wg4, out, axis=1)                          # (128, E*out)
    bg4x = jnp.repeat(bg4, out, axis=1)                          # (1, E*out)

    # experts layer 2: block-diagonal
    we2bd = _block_diag(*[we2[e] for e in range(E)])             # (E*h, E*out)
    be2f = jnp.concatenate([be2[e] for e in range(E)], axis=1)   # (1, E*out)

    # one-hot segment matrix: per-lane sum of the owning expert's block
    seg = jnp.arange(E * out) // out
    sfull = (seg[:, None] == seg[None, :]).astype(matmul_dtype)  # (E*out, E*out)

    # control | uplift heads fused (control occupies the left half).
    # Head layer 1 is tiled over experts so (gate-weighted expert softmax) @ wh1
    # == R @ wh1_orig, folding the sum over experts into the GEMM.
    wh1 = jnp.concatenate([wc1, wu1], axis=1)                    # (out, 2h)
    wh1f = jnp.tile(wh1, (E, 1))                                 # (E*out, 2h)
    bh1 = jnp.concatenate([bc1, bu1], axis=1)
    wh2 = _block_diag(wc2, wu2)                                  # (2h, 2h)
    bh2 = jnp.concatenate([bc2, bu2], axis=1)
    wh3 = _block_diag(wc3, wu3)                                  # (2h, h)
    bh3 = jnp.concatenate([bc3, bu3], axis=1)
    wh4 = _block_diag(wc4, wu4)                                  # (h, h/2)
    bh4 = jnp.concatenate([bc4, bu4], axis=1)
    whf = _block_diag(jnp.concatenate([wcl, wct], axis=1),
                      jnp.concatenate([wtl, wut], axis=1))       # (h/2, 4)
    bhf = jnp.concatenate([bcl, bct, btl, but], axis=1)          # (1, 4)

    wcast = lambda w: w.astype(matmul_dtype)
    bcast = lambda b: b.astype(jnp.float32)

    fused = (
        wcast(w0), bcast(b0),
        wcast(wg2), bcast(bg2), wcast(wg3), bcast(bg3),
        wcast(wg4x), bcast(bg4x),
        wcast(we2bd), bcast(be2f),
        sfull,
        wcast(wh1f), bcast(bh1), wcast(wh2), bcast(bh2),
        wcast(wh3), bcast(bh3), wcast(wh4), bcast(bh4),
        wcast(whf), bcast(bhf),
    )
    return fused, gate_width, out


def _round_up(a, m):
    return (a + m - 1) // m * m


# ----------------------------------------------------------------------------
# Wrapper: pallas_call with batch tiling; weights are broadcast (full blocks).
# ----------------------------------------------------------------------------
def m3tn_forward(x, fused, *, gate_width, output_dim, batch_tile=None):
    B, input_dim = x.shape
    Bp8 = _round_up(B, 8)
    if batch_tile is None:
        if Bp8 <= 8:
            batch_tile = 8
        else:
            # >= 2 grid steps so both v7x TensorCores get work; the 2048-row
            # cap keeps peak live f32 activations (~tile*256*4B) a few MiB,
            # comfortably inside default scoped-VMEM on v5e/v6e/v7x, so no
            # explicit vmem_limit_bytes is requested.
            batch_tile = min(2048, _round_up((Bp8 + 1) // 2, 8))
    B_pad = _round_up(B, batch_tile)
    if B_pad != B:
        x = jnp.pad(x, ((0, B_pad - B), (0, 0)))
    grid = (B_pad // batch_tile,)

    def full_spec(arr):
        nd = arr.ndim
        return pl.BlockSpec(arr.shape, lambda i, _nd=nd: (0,) * _nd)

    in_specs = [pl.BlockSpec((batch_tile, input_dim), lambda i: (i, 0))]
    in_specs += [full_spec(p) for p in fused]

    out_spec = pl.BlockSpec((batch_tile, 8), lambda i: (i, 0))
    out_shape = jax.ShapeDtypeStruct((B_pad, 8), jnp.float32)

    kernel = functools.partial(
        m3tn_kernel, gate_width=gate_width, out_scale=float(output_dim)
    )

    out = pl.pallas_call(
        kernel,
        grid=grid,
        in_specs=in_specs,
        out_specs=out_spec,
        out_shape=out_shape,
        compiler_params=pltpu.CompilerParams(
            dimension_semantics=("parallel",)),
    )(x, *fused)

    out = out[:B]
    c_logit = out[:, 0:1]
    c_tau = out[:, 1:2]
    t_logit = out[:, 2:3]
    u_tau = out[:, 3:4]
    c_prob = out[:, 4:5]          # sigmoid(c_logit)
    t_prob = out[:, 6:7]          # sigmoid(t_logit)
    return c_logit, c_prob, c_tau, t_logit, t_prob, u_tau


# ----------------------------------------------------------------------------
# Pure-JAX f32 reference (sanity check only).
# ----------------------------------------------------------------------------
def m3tn_reference(x, params):
    (wg1, bg1, wg2, bg2, wg3, bg3, wg4, bg4,
     we1, be1, we2, be2,
     wc1, bc1, wc2, bc2, wc3, bc3, wc4, bc4, wcl, bcl, wct, bct,
     wu1, bu1, wu2, bu2, wu3, bu3, wu4, bu4, wtl, btl, wut, but) = params

    relu = lambda v: jnp.maximum(v, 0.0)
    leaky = lambda v: jnp.where(v > 0.0, v, 0.01 * v)
    softmax = lambda z: jax.nn.softmax(z, axis=-1)
    act = relu

    g = relu(x @ wg1 + bg1)
    g = leaky(g @ wg2 + bg2)
    g = leaky(g @ wg3 + bg3)
    gate = softmax(g @ wg4 + bg4)

    R = jnp.zeros((x.shape[0], we2.shape[2]), jnp.float32)
    for e in range(we1.shape[0]):
        h = relu(x @ we1[e] + be1[e])
        o = softmax(h @ we2[e] + be2[e])
        R = R + o * gate[:, e:e + 1]

    c = act(act(act(act(R @ wc1 + bc1) @ wc2 + bc2) @ wc3 + bc3) @ wc4 + bc4)
    c_logit = c @ wcl + bcl
    c_tau = c @ wct + bct
    c_prob = jax.nn.sigmoid(c_logit)

    u = act(act(act(act(R @ wu1 + bu1) @ wu2 + bu2) @ wu3 + bu3) @ wu4 + bu4)
    t_logit = u @ wtl + btl
    u_tau = u @ wut + but
    t_prob = jax.nn.sigmoid(t_logit)

    return c_logit, c_prob, c_tau, t_logit, t_prob, u_tau


if __name__ == "__main__":
    # Small shapes consistent with the module:
    # M3TN(input_dim=32, h_dim=16, output_dim=8, num_experts=4,
    #      is_self=False, act_type='relu')
    B, input_dim, h_dim, output_dim, num_experts = 8, 32, 16, 8, 4

    key = jax.random.PRNGKey(0)
    kx, kp = jax.random.split(key)
    x = jax.random.normal(kx, (B, input_dim), jnp.float32)
    params = init_params(kp, input_dim, h_dim, output_dim, num_experts)

    # Pack/fuse once at load time (hoisted off the forward path).
    fused, gate_width, out_dim = fuse_params(params)

    fwd = jax.jit(functools.partial(
        m3tn_forward, gate_width=gate_width, output_dim=out_dim))

    outs = fwd(x, fused)
    outs = jax.block_until_ready(outs)

    refs = m3tn_reference(x, params)
    for o, r in zip(outs, refs):
        assert o.shape == (B, 1)
        # bf16 matmul operands + EUP approx reciprocals -> relaxed tolerance
        # vs. the f32 reference.
        assert jnp.allclose(o, r, atol=3e-2, rtol=3e-2), (
            float(jnp.max(jnp.abs(o - r)))
        )

    print("KERNEL_OK")
</pallas_src>

<mosaic_0001>
module attributes {stable_mosaic.version = 11 : i64} {
  func.func @m3tn_kernel(%arg0: i32, %arg1: memref<8x32xf32, #tpu.memory_space<vmem>>, %arg2: memref<32x192xbf16, #tpu.memory_space<vmem>>, %arg3: memref<1x192xf32, #tpu.memory_space<vmem>>, %arg4: memref<128x256xbf16, #tpu.memory_space<vmem>>, %arg5: memref<1x256xf32, #tpu.memory_space<vmem>>, %arg6: memref<256x128xbf16, #tpu.memory_space<vmem>>, %arg7: memref<1x128xf32, #tpu.memory_space<vmem>>, %arg8: memref<128x32xbf16, #tpu.memory_space<vmem>>, %arg9: memref<1x32xf32, #tpu.memory_space<vmem>>, %arg10: memref<64x32xbf16, #tpu.memory_space<vmem>>, %arg11: memref<1x32xf32, #tpu.memory_space<vmem>>, %arg12: memref<32x32xbf16, #tpu.memory_space<vmem>>, %arg13: memref<32x32xbf16, #tpu.memory_space<vmem>>, %arg14: memref<1x32xf32, #tpu.memory_space<vmem>>, %arg15: memref<32x32xbf16, #tpu.memory_space<vmem>>, %arg16: memref<1x32xf32, #tpu.memory_space<vmem>>, %arg17: memref<32x16xbf16, #tpu.memory_space<vmem>>, %arg18: memref<1x16xf32, #tpu.memory_space<vmem>>, %arg19: memref<16x8xbf16, #tpu.memory_space<vmem>>, %arg20: memref<1x8xf32, #tpu.memory_space<vmem>>, %arg21: memref<8x4xbf16, #tpu.memory_space<vmem>>, %arg22: memref<1x4xf32, #tpu.memory_space<vmem>>, %arg23: memref<8x8xf32, #tpu.memory_space<vmem>>) attributes {dimension_semantics = [#tpu.dimension_semantics<parallel>], iteration_bounds = array<i64: 1>, scalar_prefetch = 0 : i64, scratch_operands = 0 : i64, tpu.core_type = #tpu.core_type<tc>, window_params = [{transform_indices = @transform_0, window_bounds = array<i64: 8, 32>}, {pipeline_mode = #tpu.pipeline_mode<synchronous>, transform_indices = @transform_1, window_bounds = array<i64: 32, 192>}, {pipeline_mode = #tpu.pipeline_mode<synchronous>, transform_indices = @transform_2, window_bounds = array<i64: 1, 192>}, {pipeline_mode = #tpu.pipeline_mode<synchronous>, transform_indices = @transform_3, window_bounds = array<i64: 128, 256>}, {pipeline_mode = #tpu.pipeline_mode<synchronous>, transform_indices = @transform_4, window_bounds = array<i64: 1, 256>}, {pipeline_mode = #tpu.pipeline_mode<synchronous>, transform_indices = @transform_5, window_bounds = array<i64: 256, 128>}, {pipeline_mode = #tpu.pipeline_mode<synchronous>, transform_indices = @transform_6, window_bounds = array<i64: 1, 128>}, {pipeline_mode = #tpu.pipeline_mode<synchronous>, transform_indices = @transform_7, window_bounds = array<i64: 128, 32>}, {pipeline_mode = #tpu.pipeline_mode<synchronous>, transform_indices = @transform_8, window_bounds = array<i64: 1, 32>}, {pipeline_mode = #tpu.pipeline_mode<synchronous>, transform_indices = @transform_9, window_bounds = array<i64: 64, 32>}, {pipeline_mode = #tpu.pipeline_mode<synchronous>, transform_indices = @transform_10, window_bounds = array<i64: 1, 32>}, {pipeline_mode = #tpu.pipeline_mode<synchronous>, transform_indices = @transform_11, window_bounds = array<i64: 32, 32>}, {pipeline_mode = #tpu.pipeline_mode<synchronous>, transform_indices = @transform_12, window_bounds = array<i64: 32, 32>}, {pipeline_mode = #tpu.pipeline_mode<synchronous>, transform_indices = @transform_13, window_bounds = array<i64: 1, 32>}, {pipeline_mode = #tpu.pipeline_mode<synchronous>, transform_indices = @transform_14, window_bounds = array<i64: 32, 32>}, {pipeline_mode = #tpu.pipeline_mode<synchronous>, transform_indices = @transform_15, window_bounds = array<i64: 1, 32>}, {pipeline_mode = #tpu.pipeline_mode<synchronous>, transform_indices = @transform_16, window_bounds = array<i64: 32, 16>}, {pipeline_mode = #tpu.pipeline_mode<synchronous>, transform_indices = @transform_17, window_bounds = array<i64: 1, 16>}, {pipeline_mode = #tpu.pipeline_mode<synchronous>, transform_indices = @transform_18, window_bounds = array<i64: 16, 8>}, {pipeline_mode = #tpu.pipeline_mode<synchronous>, transform_indices = @transform_19, window_bounds = array<i64: 1, 8>}, {pipeline_mode = #tpu.pipeline_mode<synchronous>, transform_indices = @transform_20, window_bounds = array<i64: 8, 4>}, {pipeline_mode = #tpu.pipeline_mode<synchronous>, transform_indices = @transform_21, window_bounds = array<i64: 1, 4>}, {transform_indices = @transform_22, window_bounds = array<i64: 8, 8>}]} {
    %c0 = arith.constant 0 : index
    %c0_0 = arith.constant 0 : index
    %0 = vector.load %arg1[%c0, %c0_0] : memref<8x32xf32, #tpu.memory_space<vmem>>, vector<8x32xf32>
    %1 = arith.truncf %0 : vector<8x32xf32> to vector<8x32xbf16>
    %c0_1 = arith.constant 0 : index
    %c0_2 = arith.constant 0 : index
    %2 = vector.load %arg2[%c0_1, %c0_2] : memref<32x192xbf16, #tpu.memory_space<vmem>>, vector<32x192xbf16>
    %cst = arith.constant dense<0.000000e+00> : vector<8x192xf32>
    %3 = tpu.matmul %1, %2, %cst {dimension_numbers = #tpu.dot_dimension_numbers<[1], [0], [0], [1], [0, 0, 1, 1], [], []>} : vector<8x32xbf16>, vector<32x192xbf16>, vector<8x192xf32> -> vector<8x192xf32>
    %c0_3 = arith.constant 0 : index
    %c0_4 = arith.constant 0 : index
    %4 = vector.load %arg3[%c0_3, %c0_4] : memref<1x192xf32, #tpu.memory_space<vmem>>, vector<1x192xf32>
    %5 = vector.broadcast %4 : vector<1x192xf32> to vector<8x192xf32>
    %6 = arith.addf %3, %5 : vector<8x192xf32>
    %cst_5 = arith.constant 0.000000e+00 : f32
    %7 = vector.broadcast %cst_5 : f32 to vector<8x192xf32>
    %8 = arith.maximumf %6, %7 : vector<8x192xf32>
    %9 = vector.extract_strided_slice %8 {offsets = [0, 0], sizes = [8, 128], strides = [1, 1]} : vector<8x192xf32> to vector<8x128xf32>
    %10 = vector.extract_strided_slice %8 {offsets = [0, 128], sizes = [8, 64], strides = [1, 1]} : vector<8x192xf32> to vector<8x64xf32>
    %11 = arith.truncf %9 : vector<8x128xf32> to vector<8x128xbf16>
    %c0_6 = arith.constant 0 : index
    %c0_7 = arith.constant 0 : index
    %12 = vector.load %arg4[%c0_6, %c0_7] : memref<128x256xbf16, #tpu.memory_space<vmem>>, vector<128x256xbf16>
    %cst_8 = arith.constant dense<0.000000e+00> : vector<8x256xf32>
    %13 = tpu.matmul %11, %12, %cst_8 {dimension_numbers = #tpu.dot_dimension_numbers<[1], [0], [0], [1], [0, 0, 1, 1], [], []>} : vector<8x128xbf16>, vector<128x256xbf16>, vector<8x256xf32> -> vector<8x256xf32>
    %c0_9 = arith.constant 0 : index
    %c0_10 = arith.constant 0 : index
    %14 = vector.load %arg5[%c0_9, %c0_10] : memref<1x256xf32, #tpu.memory_space<vmem>>, vector<1x256xf32>
    %15 = vector.broadcast %14 : vector<1x256xf32> to vector<8x256xf32>
    %16 = arith.addf %13, %15 : vector<8x256xf32>
    %cst_11 = arith.constant 0.00999999977 : f32
    %17 = vector.broadcast %cst_11 : f32 to vector<8x256xf32>
    %18 = arith.mulf %17, %16 : vector<8x256xf32>
    %19 = arith.maximumf %16, %18 : vector<8x256xf32>
    %20 = arith.truncf %19 : vector<8x256xf32> to vector<8x256xbf16>
    %c0_12 = arith.constant 0 : index
    %c0_13 = arith.constant 0 : index
    %21 = vector.load %arg6[%c0_12, %c0_13] : memref<256x128xbf16, #tpu.memory_space<vmem>>, vector<256x128xbf16>
    %cst_14 = arith.constant dense<0.000000e+00> : vector<8x128xf32>
    %22 = tpu.matmul %20, %21, %cst_14 {dimension_numbers = #tpu.dot_dimension_numbers<[1], [0], [0], [1], [0, 0, 1, 1], [], []>} : vector<8x256xbf16>, vector<256x128xbf16>, vector<8x128xf32> -> vector<8x128xf32>
    %c0_15 = arith.constant 0 : index
    %c0_16 = arith.constant 0 : index
    %23 = vector.load %arg7[%c0_15, %c0_16] : memref<1x128xf32, #tpu.memory_space<vmem>>, vector<1x128xf32>
    %24 = vector.broadcast %23 : vector<1x128xf32> to vector<8x128xf32>
    %25 = arith.addf %22, %24 : vector<8x128xf32>
    %cst_17 = arith.constant 0.00999999977 : f32
    %26 = vector.broadcast %cst_17 : f32 to vector<8x128xf32>
    %27 = arith.mulf %26, %25 : vector<8x128xf32>
    %28 = arith.maximumf %25, %27 : vector<8x128xf32>
    %29 = arith.truncf %28 : vector<8x128xf32> to vector<8x128xbf16>
    %c0_18 = arith.constant 0 : index
    %c0_19 = arith.constant 0 : index
    %30 = vector.load %arg8[%c0_18, %c0_19] : memref<128x32xbf16, #tpu.memory_space<vmem>>, vector<128x32xbf16>
    %cst_20 = arith.constant dense<0.000000e+00> : vector<8x32xf32>
    %31 = tpu.matmul %29, %30, %cst_20 {dimension_numbers = #tpu.dot_dimension_numbers<[1], [0], [0], [1], [0, 0, 1, 1], [], []>} : vector<8x128xbf16>, vector<128x32xbf16>, vector<8x32xf32> -> vector<8x32xf32>
    %c0_21 = arith.constant 0 : index
    %c0_22 = arith.constant 0 : index
    %32 = vector.load %arg9[%c0_21, %c0_22] : memref<1x32xf32, #tpu.memory_space<vmem>>, vector<1x32xf32>
    %33 = vector.broadcast %32 : vector<1x32xf32> to vector<8x32xf32>
    %34 = arith.addf %31, %33 : vector<8x32xf32>
    %cst_23 = arith.constant dense<0xFF800000> : vector<8xf32>
    %35 = vector.multi_reduction <maximumf>, %34, %cst_23 [1] : vector<8x32xf32> to vector<8xf32>
    %36 = vector.shape_cast %35 : vector<8xf32> to vector<8x1xf32>
    %37 = vector.broadcast %36 : vector<8x1xf32> to vector<8x32xf32>
    %38 = arith.subf %34, %37 : vector<8x32xf32>
    %39 = math.exp %38 : vector<8x32xf32>
    %cst_24 = arith.constant dense<0.000000e+00> : vector<8xf32>
    %40 = vector.multi_reduction <add>, %39, %cst_24 [1] : vector<8x32xf32> to vector<8xf32>
    %41 = vector.shape_cast %40 : vector<8xf32> to vector<8x1xf32>
    %42 = tpu.reciprocal %41 {approx = true} : vector<8x1xf32> -> vector<8x1xf32>
    %cst_25 = arith.constant 8.000000e+00 : f32
    %43 = vector.broadcast %cst_25 : f32 to vector<8x1xf32>
    %44 = arith.mulf %43, %42 : vector<8x1xf32>
    %45 = vector.broadcast %44 : vector<8x1xf32> to vector<8x32xf32>
    %46 = arith.mulf %39, %45 : vector<8x32xf32>
    %47 = arith.truncf %10 : vector<8x64xf32> to vector<8x64xbf16>
    %c0_26 = arith.constant 0 : index
    %c0_27 = arith.constant 0 : index
    %48 = vector.load %arg10[%c0_26, %c0_27] : memref<64x32xbf16, #tpu.memory_space<vmem>>, vector<64x32xbf16>
    %cst_28 = arith.constant dense<0.000000e+00> : vector<8x32xf32>
    %49 = tpu.matmul %47, %48, %cst_28 {dimension_numbers = #tpu.dot_dimension_numbers<[1], [0], [0], [1], [0, 0, 1, 1], [], []>} : vector<8x64xbf16>, vector<64x32xbf16>, vector<8x32xf32> -> vector<8x32xf32>
    %c0_29 = arith.constant 0 : index
    %c0_30 = arith.constant 0 : index
    %50 = vector.load %arg11[%c0_29, %c0_30] : memref<1x32xf32, #tpu.memory_space<vmem>>, vector<1x32xf32>
    %51 = vector.broadcast %50 : vector<1x32xf32> to vector<8x32xf32>
    %52 = arith.addf %49, %51 : vector<8x32xf32>
    %cst_31 = arith.constant dense<0xFF800000> : vector<8xf32>
    %53 = vector.multi_reduction <maximumf>, %52, %cst_31 [1] : vector<8x32xf32> to vector<8xf32>
    %54 = vector.shape_cast %53 : vector<8xf32> to vector<8x1xf32>
    %55 = vector.broadcast %54 : vector<8x1xf32> to vector<8x32xf32>
    %56 = arith.subf %52, %55 : vector<8x32xf32>
    %57 = math.exp %56 : vector<8x32xf32>
    %58 = arith.truncf %57 : vector<8x32xf32> to vector<8x32xbf16>
    %c0_32 = arith.constant 0 : index
    %c0_33 = arith.constant 0 : index
    %59 = vector.load %arg12[%c0_32, %c0_33] : memref<32x32xbf16, #tpu.memory_space<vmem>>, vector<32x32xbf16>
    %cst_34 = arith.constant dense<0.000000e+00> : vector<8x32xf32>
    %60 = tpu.matmul %58, %59, %cst_34 {dimension_numbers = #tpu.dot_dimension_numbers<[1], [0], [0], [1], [0, 0, 1, 1], [], []>} : vector<8x32xbf16>, vector<32x32xbf16>, vector<8x32xf32> -> vector<8x32xf32>
    %61 = arith.mulf %57, %46 : vector<8x32xf32>
    %62 = tpu.reciprocal %60 {approx = true} : vector<8x32xf32> -> vector<8x32xf32>
    %63 = arith.mulf %61, %62 : vector<8x32xf32>
    %64 = arith.truncf %63 : vector<8x32xf32> to vector<8x32xbf16>
    %c0_35 = arith.constant 0 : index
    %c0_36 = arith.constant 0 : index
    %65 = vector.load %arg13[%c0_35, %c0_36] : memref<32x32xbf16, #tpu.memory_space<vmem>>, vector<32x32xbf16>
    %cst_37 = arith.constant dense<0.000000e+00> : vector<8x32xf32>
    %66 = tpu.matmul %64, %65, %cst_37 {dimension_numbers = #tpu.dot_dimension_numbers<[1], [0], [0], [1], [0, 0, 1, 1], [], []>} : vector<8x32xbf16>, vector<32x32xbf16>, vector<8x32xf32> -> vector<8x32xf32>
    %c0_38 = arith.constant 0 : index
    %c0_39 = arith.constant 0 : index
    %67 = vector.load %arg14[%c0_38, %c0_39] : memref<1x32xf32, #tpu.memory_space<vmem>>, vector<1x32xf32>
    %68 = vector.broadcast %67 : vector<1x32xf32> to vector<8x32xf32>
    %69 = arith.addf %66, %68 : vector<8x32xf32>
    %cst_40 = arith.constant 0.000000e+00 : f32
    %70 = vector.broadcast %cst_40 : f32 to vector<8x32xf32>
    %71 = arith.maximumf %69, %70 : vector<8x32xf32>
    %72 = arith.truncf %71 : vector<8x32xf32> to vector<8x32xbf16>
    %c0_41 = arith.constant 0 : index
    %c0_42 = arith.constant 0 : index
    %73 = vector.load %arg15[%c0_41, %c0_42] : memref<32x32xbf16, #tpu.memory_space<vmem>>, vector<32x32xbf16>
    %cst_43 = arith.constant dense<0.000000e+00> : vector<8x32xf32>
    %74 = tpu.matmul %72, %73, %cst_43 {dimension_numbers = #tpu.dot_dimension_numbers<[1], [0], [0], [1], [0, 0, 1, 1], [], []>} : vector<8x32xbf16>, vector<32x32xbf16>, vector<8x32xf32> -> vector<8x32xf32>
    %c0_44 = arith.constant 0 : index
    %c0_45 = arith.constant 0 : index
    %75 = vector.load %arg16[%c0_44, %c0_45] : memref<1x32xf32, #tpu.memory_space<vmem>>, vector<1x32xf32>
    %76 = vector.broadcast %75 : vector<1x32xf32> to vector<8x32xf32>
    %77 = arith.addf %74, %76 : vector<8x32xf32>
    %cst_46 = arith.constant 0.000000e+00 : f32
    %78 = vector.broadcast %cst_46 : f32 to vector<8x32xf32>
    %79 = arith.maximumf %77, %78 : vector<8x32xf32>
    %80 = arith.truncf %79 : vector<8x32xf32> to vector<8x32xbf16>
    %c0_47 = arith.constant 0 : index
    %c0_48 = arith.constant 0 : index
    %81 = vector.load %arg17[%c0_47, %c0_48] : memref<32x16xbf16, #tpu.memory_space<vmem>>, vector<32x16xbf16>
    %cst_49 = arith.constant dense<0.000000e+00> : vector<8x16xf32>
    %82 = tpu.matmul %80, %81, %cst_49 {dimension_numbers = #tpu.dot_dimension_numbers<[1], [0], [0], [1], [0, 0, 1, 1], [], []>} : vector<8x32xbf16>, vector<32x16xbf16>, vector<8x16xf32> -> vector<8x16xf32>
    %c0_50 = arith.constant 0 : index
    %c0_51 = arith.constant 0 : index
    %83 = vector.load %arg18[%c0_50, %c0_51] : memref<1x16xf32, #tpu.memory_space<vmem>>, vector<1x16xf32>
    %84 = vector.broadcast %83 : vector<1x16xf32> to vector<8x16xf32>
    %85 = arith.addf %82, %84 : vector<8x16xf32>
    %cst_52 = arith.constant 0.000000e+00 : f32
    %86 = vector.broadcast %cst_52 : f32 to vector<8x16xf32>
    %87 = arith.maximumf %85, %86 : vector<8x16xf32>
    %88 = arith.truncf %87 : vector<8x16xf32> to vector<8x16xbf16>
    %c0_53 = arith.constant 0 : index
    %c0_54 = arith.constant 0 : index
    %89 = vector.load %arg19[%c0_53, %c0_54] : memref<16x8xbf16, #tpu.memory_space<vmem>>, vector<16x8xbf16>
    %cst_55 = arith.constant dense<0.000000e+00> : vector<8x8xf32>
    %90 = tpu.matmul %88, %89, %cst_55 {dimension_numbers = #tpu.dot_dimension_numbers<[1], [0], [0], [1], [0, 0, 1, 1], [], []>} : vector<8x16xbf16>, vector<16x8xbf16>, vector<8x8xf32> -> vector<8x8xf32>
    %c0_56 = arith.constant 0 : index
    %c0_57 = arith.constant 0 : index
    %91 = vector.load %arg20[%c0_56, %c0_57] : memref<1x8xf32, #tpu.memory_space<vmem>>, vector<1x8xf32>
    %92 = vector.broadcast %91 : vector<1x8xf32> to vector<8x8xf32>
    %93 = arith.addf %90, %92 : vector<8x8xf32>
    %cst_58 = arith.constant 0.000000e+00 : f32
    %94 = vector.broadcast %cst_58 : f32 to vector<8x8xf32>
    %95 = arith.maximumf %93, %94 : vector<8x8xf32>
    %96 = arith.truncf %95 : vector<8x8xf32> to vector<8x8xbf16>
    %c0_59 = arith.constant 0 : index
    %c0_60 = arith.constant 0 : index
    %97 = vector.load %arg21[%c0_59, %c0_60] : memref<8x4xbf16, #tpu.memory_space<vmem>>, vector<8x4xbf16>
    %cst_61 = arith.constant dense<0.000000e+00> : vector<8x4xf32>
    %98 = tpu.matmul %96, %97, %cst_61 {dimension_numbers = #tpu.dot_dimension_numbers<[1], [0], [0], [1], [0, 0, 1, 1], [], []>} : vector<8x8xbf16>, vector<8x4xbf16>, vector<8x4xf32> -> vector<8x4xf32>
    %c0_62 = arith.constant 0 : index
    %c0_63 = arith.constant 0 : index
    %99 = vector.load %arg22[%c0_62, %c0_63] : memref<1x4xf32, #tpu.memory_space<vmem>>, vector<1x4xf32>
    %100 = vector.broadcast %99 : vector<1x4xf32> to vector<8x4xf32>
    %101 = arith.addf %98, %100 : vector<8x4xf32>
    %cst_64 = arith.constant 0.000000e+00 : f32
    %102 = vector.broadcast %cst_64 : f32 to vector<8x4xf32>
    %103 = arith.subf %102, %101 : vector<8x4xf32>
    %104 = math.exp %103 : vector<8x4xf32>
    %cst_65 = arith.constant 1.000000e+00 : f32
    %105 = vector.broadcast %cst_65 : f32 to vector<8x4xf32>
    %106 = arith.addf %105, %104 : vector<8x4xf32>
    %107 = tpu.reciprocal %106 {approx = true} : vector<8x4xf32> -> vector<8x4xf32>
    %108 = tpu.concatenate %101, %107 in 1 : vector<8x4xf32>, vector<8x4xf32> -> vector<8x8xf32>
    %c0_66 = arith.constant 0 : index
    %c0_67 = arith.constant 0 : index
    %109 = vector.load %arg23[%c0_66, %c0_67] : memref<8x8xf32, #tpu.memory_space<vmem>>, vector<8x8xf32>
    tpu.vector_store %arg23[%c0_66, %c0_67], %108 {strides = array<i32>} : memref<8x8xf32, #tpu.memory_space<vmem>>, vector<8x8xf32>,
    return
  }
  func.func @transform_0(%arg0: i32) -> (i32, i32) {
    %c0_i32 = arith.constant 0 : i32
    %c0_i32_0 = arith.constant 0 : i32
    return %arg0, %c0_i32 : i32, i32
  }
  func.func @transform_1(%arg0: i32) -> (i32, i32) {
    %c0_i32 = arith.constant 0 : i32
    %c0_i32_0 = arith.constant 0 : i32
    %c0_i32_1 = arith.constant 0 : i32
    return %c0_i32, %c0_i32_0 : i32, i32
  }
  func.func @transform_2(%arg0: i32) -> (i32, i32) {
    %c0_i32 = arith.constant 0 : i32
    %c0_i32_0 = arith.constant 0 : i32
    %c0_i32_1 = arith.constant 0 : i32
    return %c0_i32, %c0_i32_0 : i32, i32
  }
  func.func @transform_3(%arg0: i32) -> (i32, i32) {
    %c0_i32 = arith.constant 0 : i32
    %c0_i32_0 = arith.constant 0 : i32
    %c0_i32_1 = arith.constant 0 : i32
    return %c0_i32, %c0_i32_0 : i32, i32
  }
  func.func @transform_4(%arg0: i32) -> (i32, i32) {
    %c0_i32 = arith.constant 0 : i32
    %c0_i32_0 = arith.constant 0 : i32
    %c0_i32_1 = arith.constant 0 : i32
    return %c0_i32, %c0_i32_0 : i32, i32
  }
  func.func @transform_5(%arg0: i32) -> (i32, i32) {
    %c0_i32 = arith.constant 0 : i32
    %c0_i32_0 = arith.constant 0 : i32
    %c0_i32_1 = arith.constant 0 : i32
    return %c0_i32, %c0_i32_0 : i32, i32
  }
  func.func @transform_6(%arg0: i32) -> (i32, i32) {
    %c0_i32 = arith.constant 0 : i32
    %c0_i32_0 = arith.constant 0 : i32
    %c0_i32_1 = arith.constant 0 : i32
    return %c0_i32, %c0_i32_0 : i32, i32
  }
  func.func @transform_7(%arg0: i32) -> (i32, i32) {
    %c0_i32 = arith.constant 0 : i32
    %c0_i32_0 = arith.constant 0 : i32
    %c0_i32_1 = arith.constant 0 : i32
    return %c0_i32, %c0_i32_0 : i32, i32
  }
  func.func @transform_8(%arg0: i32) -> (i32, i32) {
    %c0_i32 = arith.constant 0 : i32
    %c0_i32_0 = arith.constant 0 : i32
    %c0_i32_1 = arith.constant 0 : i32
    return %c0_i32, %c0_i32_0 : i32, i32
  }
  func.func @transform_9(%arg0: i32) -> (i32, i32) {
    %c0_i32 = arith.constant 0 : i32
    %c0_i32_0 = arith.constant 0 : i32
    %c0_i32_1 = arith.constant 0 : i32
    return %c0_i32, %c0_i32_0 : i32, i32
  }
  func.func @transform_10(%arg0: i32) -> (i32, i32) {
    %c0_i32 = arith.constant 0 : i32
    %c0_i32_0 = arith.constant 0 : i32
    %c0_i32_1 = arith.constant 0 : i32
    return %c0_i32, %c0_i32_0 : i32, i32
  }
  func.func @transform_11(%arg0: i32) -> (i32, i32) {
    %c0_i32 = arith.constant 0 : i32
    %c0_i32_0 = arith.constant 0 : i32
    %c0_i32_1 = arith.constant 0 : i32
    return %c0_i32, %c0_i32_0 : i32, i32
  }
  func.func @transform_12(%arg0: i32) -> (i32, i32) {
    %c0_i32 = arith.constant 0 : i32
    %c0_i32_0 = arith.constant 0 : i32
    %c0_i32_1 = arith.constant 0 : i32
    return %c0_i32, %c0_i32_0 : i32, i32
  }
  func.func @transform_13(%arg0: i32) -> (i32, i32) {
    %c0_i32 = arith.constant 0 : i32
    %c0_i32_0 = arith.constant 0 : i32
    %c0_i32_1 = arith.constant 0 : i32
    return %c0_i32, %c0_i32_0 : i32, i32
  }
  func.func @transform_14(%arg0: i32) -> (i32, i32) {
    %c0_i32 = arith.constant 0 : i32
    %c0_i32_0 = arith.constant 0 : i32
    %c0_i32_1 = arith.constant 0 : i32
    return %c0_i32, %c0_i32_0 : i32, i32
  }
  func.func @transform_15(%arg0: i32) -> (i32, i32) {
    %c0_i32 = arith.constant 0 : i32
    %c0_i32_0 = arith.constant 0 : i32
    %c0_i32_1 = arith.constant 0 : i32
    return %c0_i32, %c0_i32_0 : i32, i32
  }
  func.func @transform_16(%arg0: i32) -> (i32, i32) {
    %c0_i32 = arith.constant 0 : i32
    %c0_i32_0 = arith.constant 0 : i32
    %c0_i32_1 = arith.constant 0 : i32
    return %c0_i32, %c0_i32_0 : i32, i32
  }
  func.func @transform_17(%arg0: i32) -> (i32, i32) {
    %c0_i32 = arith.constant 0 : i32
    %c0_i32_0 = arith.constant 0 : i32
    %c0_i32_1 = arith.constant 0 : i32
    return %c0_i32, %c0_i32_0 : i32, i32
  }
  func.func @transform_18(%arg0: i32) -> (i32, i32) {
    %c0_i32 = arith.constant 0 : i32
    %c0_i32_0 = arith.constant 0 : i32
    %c0_i32_1 = arith.constant 0 : i32
    return %c0_i32, %c0_i32_0 : i32, i32
  }
  func.func @transform_19(%arg0: i32) -> (i32, i32) {
    %c0_i32 = arith.constant 0 : i32
    %c0_i32_0 = arith.constant 0 : i32
    %c0_i32_1 = arith.constant 0 : i32
    return %c0_i32, %c0_i32_0 : i32, i32
  }
  func.func @transform_20(%arg0: i32) -> (i32, i32) {
    %c0_i32 = arith.constant 0 : i32
    %c0_i32_0 = arith.constant 0 : i32
    %c0_i32_1 = arith.constant 0 : i32
    return %c0_i32, %c0_i32_0 : i32, i32
  }
  func.func @transform_21(%arg0: i32) -> (i32, i32) {
    %c0_i32 = arith.constant 0 : i32
    %c0_i32_0 = arith.constant 0 : i32
    %c0_i32_1 = arith.constant 0 : i32
    return %c0_i32, %c0_i32_0 : i32, i32
  }
  func.func @transform_22(%arg0: i32) -> (i32, i32) {
    %c0_i32 = arith.constant 0 : i32
    %c0_i32_0 = arith.constant 0 : i32
    return %arg0, %c0_i32 : i32, i32
  }
}

</mosaic_0001>

<llo_original>
// kernel: m3tn_forward.1
$region0: #{m3tn_forward.1}
  #allocation0 [shape = 'u32[]', space=smem, size = 0x4, offset = 0x4, fixed_abs, tag = 'smem constant byte address 0x4 - core index']
  #allocation1 [shape = 'u32[144,128]{1,0:T(1,128)}', space=vmem, size = 0x12000, scoped, tag = 'internal scratch']
  %s0 = inlined_call_operand.hbm [shape: f32[8,32], index: 0, kind: input, shape index: {}]
  %s1 = inlined_call_operand.vmem [shape: bf16[32,192], index: 1, kind: input, shape index: {}]
  %s2 = inlined_call_operand.hbm [shape: f32[1,192], index: 2, kind: input, shape index: {}]
  %s3 = inlined_call_operand.vmem [shape: bf16[128,256], index: 3, kind: input, shape index: {}]
  %s4 = inlined_call_operand.hbm [shape: f32[1,256], index: 4, kind: input, shape index: {}]
  %s5 = inlined_call_operand.hbm [shape: bf16[256,128], index: 5, kind: input, shape index: {}]
  %s6 = inlined_call_operand.hbm [shape: f32[1,128], index: 6, kind: input, shape index: {}]
  %s7 = inlined_call_operand.vmem [shape: bf16[128,32], index: 7, kind: input, shape index: {}]
  %s8 = inlined_call_operand.vmem [shape: f32[1,32], index: 8, kind: input, shape index: {}]
  %s9 = inlined_call_operand.vmem [shape: bf16[64,32], index: 9, kind: input, shape index: {}]
  %s10 = inlined_call_operand.hbm [shape: f32[1,32], index: 10, kind: input, shape index: {}]
  %s11 = inlined_call_operand.vmem [shape: bf16[32,32], index: 11, kind: input, shape index: {}]
  %s12 = inlined_call_operand.hbm [shape: bf16[32,32], index: 12, kind: input, shape index: {}]
  %s13 = inlined_call_operand.hbm [shape: f32[1,32], index: 13, kind: input, shape index: {}]
  %s14 = inlined_call_operand.hbm [shape: bf16[32,32], index: 14, kind: input, shape index: {}]
  %s15 = inlined_call_operand.vmem [shape: f32[1,32], index: 15, kind: input, shape index: {}]
  %s16 = inlined_call_operand.vmem [shape: bf16[32,16], index: 16, kind: input, shape index: {}]
  %s17 = inlined_call_operand.vmem [shape: f32[1,16], index: 17, kind: input, shape index: {}]
  %s18 = inlined_call_operand.vmem [shape: bf16[16,8], index: 18, kind: input, shape index: {}]
  %s19 = inlined_call_operand.vmem [shape: f32[1,8], index: 19, kind: input, shape index: {}]
  %s20 = inlined_call_operand.vmem [shape: bf16[8,4], index: 20, kind: input, shape index: {}]
  %s21 = inlined_call_operand.vmem [shape: f32[1,4], index: 21, kind: input, shape index: {}]
  %s22 = inlined_call_operand.vmem [shape: f32[8,8], index: 22, kind: output, shape index: {}]
  %s23 = sld [smem:[#allocation0]]
  $region134: #{m3tn_forward.1} parent=0
    _
  %s25 = ssub.s32 1, %s23
  %s26 = scalar_select 0, %s25, %s23
  $region1: #{m3tn_forward.1} parent=0
    #allocation2 [shape = 'u8[4096]{0}', space=vmem, size = 0x1000, scoped, tag = 'input window, operand 0, single buffered']
    #allocation3 [shape = 's32[1]{0}', space=sflag, size = 0x4, scoped, tag = 'scoped memory for m3tn_forward.1']
    #allocation4 [shape = 'u8[1024]{0}', space=vmem, size = 0x400, scoped, tag = 'input window, operand 2, single buffered']
    #allocation5 [shape = 's32[1]{0}', space=sflag, size = 0x4, scoped, tag = 'scoped memory for m3tn_forward.1']
    #allocation6 [shape = 'u8[1024]{0}', space=vmem, size = 0x400, scoped, tag = 'input window, operand 4, single buffered']
    #allocation7 [shape = 'u8[65536]{0}', space=vmem, size = 0x10000, scoped, tag = 'input window, operand 5, single buffered']
    #allocation8 [shape = 's32[1]{0}', space=sflag, size = 0x4, scoped, tag = 'scoped memory for m3tn_forward.1']
    #allocation9 [shape = 'u8[512]{0}', space=vmem, size = 0x400, scoped, tag = 'input window, operand 6, single buffered']
    #allocation10 [shape = 'u8[512]{0}', space=vmem, size = 0x400, scoped, tag = 'input window, operand 10, single buffered']
    #allocation11 [shape = 's32[1]{0}', space=sflag, size = 0x4, scoped, tag = 'scoped memory for m3tn_forward.1']
    #allocation12 [shape = 'u8[8192]{0}', space=vmem, size = 0x2000, scoped, tag = 'input window, operand 12, single buffered']
    #allocation13 [shape = 'u8[512]{0}', space=vmem, size = 0x400, scoped, tag = 'input window, operand 13, single buffered']
    #allocation14 [shape = 's32[1]{0}', space=sflag, size = 0x4, scoped, tag = 'scoped memory for m3tn_forward.1']
    #allocation15 [shape = 'u8[8192]{0}', space=vmem, size = 0x2000, scoped, tag = 'input window, operand 14, single buffered']
    %27 = vsyncpa [#allocation3], 0
    %28 = vsyncpa [#allocation5], 0
    %29 = vsyncpa [#allocation8], 0
    %30 = vsyncpa [#allocation11], 0
    %31 = vsyncpa [#allocation14], 0
    // Predicated region
    $region2: #{m3tn_forward.1} parent=1 // pred_check
      _
    $region3: #{m3tn_forward.1} parent=1 // pred_check_branch
      %33 = sbr.rel (0) target = $region5
    $region4: #{m3tn_forward.1} parent=1 // pred_region
      %s35 = ssub.s32 128, 128
      %36 = vsyncadd [#allocation3], %s35
      %s38 = sshll.u32 [#allocation2], 4
      %s39 = int_to_ptr.vmem [resolvable:$true] %s38
      %41 = dma.hbm_to_vmem [thread:$0]  %s0, 128, %s39, [#allocation3]
    $region5: #{m3tn_forward.1} parent=1 // pred_fallthru
      _
    // Predicated region
    $region6: #{m3tn_forward.1} parent=1 // pred_check
      _
    $region7: #{m3tn_forward.1} parent=1 // pred_check_branch
      %43 = sbr.rel (0) target = $region9
    $region8: #{m3tn_forward.1} parent=1 // pred_region
      _
    $region9: #{m3tn_forward.1} parent=1 // pred_fallthru
      _
    // Predicated region
    $region10: #{m3tn_forward.1} parent=1 // pred_check
      _
    $region11: #{m3tn_forward.1} parent=1 // pred_check_branch
      %45 = sbr.rel (0) target = $region13
    $region12: #{m3tn_forward.1} parent=1 // pred_region
      %s47 = ssub.s32 32, 32
      %48 = vsyncadd [#allocation5], %s47
      %s50 = sshll.u32 [#allocation4], 4
      %s51 = int_to_ptr.vmem [resolvable:$true] %s50
      %53 = dma.hbm_to_vmem [thread:$0]  %s2, 32, %s51, [#allocation5]
    $region13: #{m3tn_forward.1} parent=1 // pred_fallthru
      _
    // Predicated region
    $region14: #{m3tn_forward.1} parent=1 // pred_check
      _
    $region15: #{m3tn_forward.1} parent=1 // pred_check_branch
      %55 = sbr.rel (0) target = $region17
    $region16: #{m3tn_forward.1} parent=1 // pred_region
      _
    $region17: #{m3tn_forward.1} parent=1 // pred_fallthru
      _
    // Predicated region
    $region18: #{m3tn_forward.1} parent=1 // pred_check
      _
    $region19: #{m3tn_forward.1} parent=1 // pred_check_branch
      %57 = sbr.rel (0) target = $region21
    $region20: #{m3tn_forward.1} parent=1 // pred_region
      %s59 = ssub.s32 32, 32
      %60 = vsyncadd [#allocation5], %s59
      %s62 = sshll.u32 [#allocation6], 4
      %s63 = int_to_ptr.vmem [resolvable:$true] %s62
      %65 = dma.hbm_to_vmem [thread:$0]  %s4, 32, %s63, [#allocation5]
    $region21: #{m3tn_forward.1} parent=1 // pred_fallthru
      _
    // Predicated region
    $region22: #{m3tn_forward.1} parent=1 // pred_check
      _
    $region23: #{m3tn_forward.1} parent=1 // pred_check_branch
      %67 = sbr.rel (0) target = $region25
    $region24: #{m3tn_forward.1} parent=1 // pred_region
      %s69 = ssub.s32 2048, 2048
      %70 = vsyncadd [#allocation8], %s69
      %s71 = sshll.u32 [#allocation7], 4
      %s72 = int_to_ptr.vmem [resolvable:$true] %s71
      %77 = dma.hbm_to_vmem [thread:$0]  %s5, 2048, %s72, [#allocation8], 64, 64, 4
    $region25: #{m3tn_forward.1} parent=1 // pred_fallthru
      _
    // Predicated region
    $region26: #{m3tn_forward.1} parent=1 // pred_check
      _
    $region27: #{m3tn_forward.1} parent=1 // pred_check_branch
      %79 = sbr.rel (0) target = $region29
    $region28: #{m3tn_forward.1} parent=1 // pred_region
      %s81 = ssub.s32 16, 16
      %82 = vsyncadd [#allocation8], %s81
      %s84 = sshll.u32 [#allocation9], 4
      %s85 = int_to_ptr.vmem [resolvable:$true] %s84
      %87 = dma.hbm_to_vmem [thread:$0]  %s6, 16, %s85, [#allocation8]
    $region29: #{m3tn_forward.1} parent=1 // pred_fallthru
      _
    // Predicated region
    $region30: #{m3tn_forward.1} parent=1 // pred_check
      _
    $region31: #{m3tn_forward.1} parent=1 // pred_check_branch
      %89 = sbr.rel (0) target = $region33
    $region32: #{m3tn_forward.1} parent=1 // pred_region
      _
    $region33: #{m3tn_forward.1} parent=1 // pred_fallthru
      _
    // Predicated region
    $region34: #{m3tn_forward.1} parent=1 // pred_check
      _
    $region35: #{m3tn_forward.1} parent=1 // pred_check_branch
      %91 = sbr.rel (0) target = $region37
    $region36: #{m3tn_forward.1} parent=1 // pred_region
      _
    $region37: #{m3tn_forward.1} parent=1 // pred_fallthru
      _
    // Predicated region
    $region38: #{m3tn_forward.1} parent=1 // pred_check
      _
    $region39: #{m3tn_forward.1} parent=1 // pred_check_branch
      %93 = sbr.rel (0) target = $region41
    $region40: #{m3tn_forward.1} parent=1 // pred_region
      _
    $region41: #{m3tn_forward.1} parent=1 // pred_fallthru
      _
    // Predicated region
    $region42: #{m3tn_forward.1} parent=1 // pred_check
      _
    $region43: #{m3tn_forward.1} parent=1 // pred_check_branch
      %95 = sbr.rel (0) target = $region45
    $region44: #{m3tn_forward.1} parent=1 // pred_region
      %s97 = ssub.s32 16, 16
      %98 = vsyncadd [#allocation11], %s97
      %s100 = sshll.u32 [#allocation10], 4
      %s101 = int_to_ptr.vmem [resolvable:$true] %s100
      %103 = dma.hbm_to_vmem [thread:$0]  %s10, 16, %s101, [#allocation11]
    $region45: #{m3tn_forward.1} parent=1 // pred_fallthru
      _
    // Predicated region
    $region46: #{m3tn_forward.1} parent=1 // pred_check
      _
    $region47: #{m3tn_forward.1} parent=1 // pred_check_branch
      %105 = sbr.rel (0) target = $region49
    $region48: #{m3tn_forward.1} parent=1 // pred_region
      _
    $region49: #{m3tn_forward.1} parent=1 // pred_fallthru
      _
    // Predicated region
    $region50: #{m3tn_forward.1} parent=1 // pred_check
      _
    $region51: #{m3tn_forward.1} parent=1 // pred_check_branch
      %107 = sbr.rel (0) target = $region53
    $region52: #{m3tn_forward.1} parent=1 // pred_region
      %s109 = ssub.s32 256, 256
      %110 = vsyncadd [#allocation11], %s109
      %s111 = sshll.u32 [#allocation12], 4
      %s112 = int_to_ptr.vmem [resolvable:$true] %s111
      %117 = dma.hbm_to_vmem [thread:$0]  %s12, 256, %s112, [#allocation11], 64, 64, 4
    $region53: #{m3tn_forward.1} parent=1 // pred_fallthru
      _
    // Predicated region
    $region54: #{m3tn_forward.1} parent=1 // pred_check
      _
    $region55: #{m3tn_forward.1} parent=1 // pred_check_branch
      %119 = sbr.rel (0) target = $region57
    $region56: #{m3tn_forward.1} parent=1 // pred_region
      %s121 = ssub.s32 16, 16
      %122 = vsyncadd [#allocation14], %s121
      %s124 = sshll.u32 [#allocation13], 4
      %s125 = int_to_ptr.vmem [resolvable:$true] %s124
      %127 = dma.hbm_to_vmem [thread:$0]  %s13, 16, %s125, [#allocation14]
    $region57: #{m3tn_forward.1} parent=1 // pred_fallthru
      _
    // Predicated region
    $region58: #{m3tn_forward.1} parent=1 // pred_check
      _
    $region59: #{m3tn_forward.1} parent=1 // pred_check_branch
      %129 = sbr.rel (0) target = $region61
    $region60: #{m3tn_forward.1} parent=1 // pred_region
      %s131 = ssub.s32 256, 256
      %132 = vsyncadd [#allocation14], %s131
      %s133 = sshll.u32 [#allocation15], 4
      %s134 = int_to_ptr.vmem [resolvable:$true] %s133
      %139 = dma.hbm_to_vmem [thread:$0]  %s14, 256, %s134, [#allocation14], 64, 64, 4
    $region61: #{m3tn_forward.1} parent=1 // pred_fallthru
      _
    // Predicated region
    $region62: #{m3tn_forward.1} parent=1 // pred_check
      _
    $region63: #{m3tn_forward.1} parent=1 // pred_check_branch
      %141 = sbr.rel (0) target = $region65
    $region64: #{m3tn_forward.1} parent=1 // pred_region
      _
    $region65: #{m3tn_forward.1} parent=1 // pred_fallthru
      _
    // Predicated region
    $region66: #{m3tn_forward.1} parent=1 // pred_check
      _
    $region67: #{m3tn_forward.1} parent=1 // pred_check_branch
      %143 = sbr.rel (0) target = $region69
    $region68: #{m3tn_forward.1} parent=1 // pred_region
      _
    $region69: #{m3tn_forward.1} parent=1 // pred_fallthru
      _
    // Predicated region
    $region70: #{m3tn_forward.1} parent=1 // pred_check
      _
    $region71: #{m3tn_forward.1} parent=1 // pred_check_branch
      %145 = sbr.rel (0) target = $region73
    $region72: #{m3tn_forward.1} parent=1 // pred_region
      _
    $region73: #{m3tn_forward.1} parent=1 // pred_fallthru
      _
    // Predicated region
    $region74: #{m3tn_forward.1} parent=1 // pred_check
      _
    $region75: #{m3tn_forward.1} parent=1 // pred_check_branch
      %147 = sbr.rel (0) target = $region77
    $region76: #{m3tn_forward.1} parent=1 // pred_region
      _
    $region77: #{m3tn_forward.1} parent=1 // pred_fallthru
      _
    // Predicated region
    $region78: #{m3tn_forward.1} parent=1 // pred_check
      _
    $region79: #{m3tn_forward.1} parent=1 // pred_check_branch
      %149 = sbr.rel (0) target = $region81
    $region80: #{m3tn_forward.1} parent=1 // pred_region
      _
    $region81: #{m3tn_forward.1} parent=1 // pred_fallthru
      _
    // Predicated region
    $region82: #{m3tn_forward.1} parent=1 // pred_check
      _
    $region83: #{m3tn_forward.1} parent=1 // pred_check_branch
      %151 = sbr.rel (0) target = $region85
    $region84: #{m3tn_forward.1} parent=1 // pred_region
      _
    $region85: #{m3tn_forward.1} parent=1 // pred_fallthru
      _
    // Predicated region
    $region86: #{m3tn_forward.1} parent=1 // pred_check
      _
    $region87: #{m3tn_forward.1} parent=1 // pred_check_branch
      %153 = sbr.rel (0) target = $region89
    $region88: #{m3tn_forward.1} parent=1 // pred_region
      _
    $region89: #{m3tn_forward.1} parent=1 // pred_fallthru
      _
    // Predicated region
    $region90: #{m3tn_forward.1} parent=1 // pred_check
      _
    $region91: #{m3tn_forward.1} parent=1 // pred_check_branch
      %155 = sbr.rel (0) target = $region93
    $region92: #{m3tn_forward.1} parent=1 // pred_region
      %156 = dma.done [#allocation3], 128
    $region93: #{m3tn_forward.1} parent=1 // pred_fallthru
      _
    // Predicated region
    $region94: #{m3tn_forward.1} parent=1 // pred_check
      _
    $region95: #{m3tn_forward.1} parent=1 // pred_check_branch
      %158 = sbr.rel (0) target = $region97
    $region96: #{m3tn_forward.1} parent=1 // pred_region
      %159 = dma.done [#allocation5], 32
    $region97: #{m3tn_forward.1} parent=1 // pred_fallthru
      _
    // Predicated region
    $region98: #{m3tn_forward.1} parent=1 // pred_check
      _
    $region99: #{m3tn_forward.1} parent=1 // pred_check_branch
      %161 = sbr.rel (0) target = $region101
    $region100: #{m3tn_forward.1} parent=1 // pred_region
      %162 = dma.done [#allocation5], 32
    $region101: #{m3tn_forward.1} parent=1 // pred_fallthru
      _
    // Predicated region
    $region102: #{m3tn_forward.1} parent=1 // pred_check
      _
    $region103: #{m3tn_forward.1} parent=1 // pred_check_branch
      %164 = sbr.rel (0) target = $region105
    $region104: #{m3tn_forward.1} parent=1 // pred_region
      %165 = dma.done [#allocation8], 2048
    $region105: #{m3tn_forward.1} parent=1 // pred_fallthru
      _
    // Predicated region
    $region106: #{m3tn_forward.1} parent=1 // pred_check
      _
    $region107: #{m3tn_forward.1} parent=1 // pred_check_branch
      %167 = sbr.rel (0) target = $region109
    $region108: #{m3tn_forward.1} parent=1 // pred_region
      %168 = dma.done [#allocation8], 16
    $region109: #{m3tn_forward.1} parent=1 // pred_fallthru
      _
    // Predicated region
    $region110: #{m3tn_forward.1} parent=1 // pred_check
      _
    $region111: #{m3tn_forward.1} parent=1 // pred_check_branch
      %170 = sbr.rel (0) target = $region113
    $region112: #{m3tn_forward.1} parent=1 // pred_region
      %171 = dma.done [#allocation11], 16
    $region113: #{m3tn_forward.1} parent=1 // pred_fallthru
      _
    // Predicated region
    $region114: #{m3tn_forward.1} parent=1 // pred_check
      _
    $region115: #{m3tn_forward.1} parent=1 // pred_check_branch
      %173 = sbr.rel (0) target = $region117
    $region116: #{m3tn_forward.1} parent=1 // pred_region
      %174 = dma.done [#allocation11], 256
    $region117: #{m3tn_forward.1} parent=1 // pred_fallthru
      _
    // Predicated region
    $region118: #{m3tn_forward.1} parent=1 // pred_check
      _
    $region119: #{m3tn_forward.1} parent=1 // pred_check_branch
      %176 = sbr.rel (0) target = $region121
    $region120: #{m3tn_forward.1} parent=1 // pred_region
      %177 = dma.done [#allocation14], 16
    $region121: #{m3tn_forward.1} parent=1 // pred_fallthru
      _
    // Predicated region
    $region122: #{m3tn_forward.1} parent=1 // pred_check
      _
    $region123: #{m3tn_forward.1} parent=1 // pred_check_branch
      %179 = sbr.rel (0) target = $region125
    $region124: #{m3tn_forward.1} parent=1 // pred_region
      %180 = dma.done [#allocation14], 256
    $region125: #{m3tn_forward.1} parent=1 // pred_fallthru
      _
    %v182 = vld [vmem:[#allocation2] sm:$0xff]
    %v183 = vpack.c.bf16 %v182, %v182
    %v184 = vld [vmem:[%s1] sm:$0xff]
    %v185 = vld [vmem:[%s1 + $0x8] sm:$0xff]
    %v186 = vld [vmem:[%s1 + $0x10] sm:$0xff]
    %v187 = vld [vmem:[%s1 + $0x18] sm:$0xff]
    %v188 = vld [vmem:[#allocation4] sm:$0x3]
    %v190 = vlaneseq
    %v191 = vshrl.u32 %v190, 7
    %v192 = vsub.s32 0, %v191
    %v193 = vrot.slane %v188, %v192
    %v194 = vlaneseq
    %v195 = vshrl.u32 %v194, 7
    %v196 = vsub.s32 1, %v195
    %v197 = vrot.slane %v188, %v196
    %v204 = vunpack.c.l.b16 %v184
    %v205 = vunpack.c.h.b16 %v184
    %v206 = vunpack.c.l.b16 %v185
    %v207 = vunpack.c.h.b16 %v185
    %v208 = vunpack.c.l.b16 %v186
    %v209 = vunpack.c.h.b16 %v186
    %v210 = vunpack.c.l.b16 %v187
    %v211 = vunpack.c.h.b16 %v187
    %v212 = vpack.c.b16 %v206, %v204
    %v213 = vpack.c.b16 %v207, %v205
    %v214 = vpack.c.b16 %v210, %v208
    %v215 = vpack.c.b16 %v211, %v209
    %vm220 = vcmask 261120
    %v222 = vsel %vm220, %v183, 0
    %224 = vmatprep.subr.bf16.mxu0 %v213
    %225 = vmatpush1.bf16.msra.mxu0 %v212
    %226 = vmatprep.subr.bf16.mxu0 %v215
    %227 = vmatpush1.bf16.msra.mxu0 %v214
    %228 = vmatprep.subr.bf16.mxu0 0
    %229 = vmatpush1.bf16.msra.mxu0 0
    %230 = vmatprep.subr.bf16.mxu0 0
    %231 = vmatpush1.bf16.msra.mxu0 0
    %232 = vmatprep.subr.bf16.mxu0 0
    %233 = vmatpush1.bf16.msra.mxu0 0
    %234 = vmatprep.subr.bf16.mxu0 0
    %235 = vmatpush1.bf16.msra.mxu0 0
    %236 = vmatprep.subr.bf16.mxu0 0
    %237 = vmatpush1.bf16.msra.mxu0 0
    %238 = vmatprep.subr.bf16.mxu0 0
    %239 = vmatpush1.bf16.msra.mxu0 0
    %240 = vmatprep.subr.bf16.mxu0 0
    %241 = vmatpush1.bf16.msra.mxu0 0
    %242 = vmatprep.subr.bf16.mxu0 0
    %243 = vmatpush1.bf16.msra.mxu0 0
    %244 = vmatprep.subr.bf16.mxu0 0
    %245 = vmatpush1.bf16.msra.mxu0 0
    %246 = vmatprep.subr.bf16.mxu0 0
    %247 = vmatpush1.bf16.msra.mxu0 0
    %248 = vmatprep.subr.bf16.mxu0 0
    %249 = vmatpush1.bf16.msra.mxu0 0
    %250 = vmatprep.subr.bf16.mxu0 0
    %251 = vmatpush1.bf16.msra.mxu0 0
    %252 = vmatprep.subr.bf16.mxu0 0
    %253 = vmatpush1.bf16.msra.mxu0 0
    %254 = vmatprep.subr.bf16.mxu0 0
    %255 = vmatpush1.bf16.msra.mxu0 0
    %256 = vmatprep.mubr.bf16.mxu0 0
    %257 = vmatmul.mubr.bf16.gmra.mrb[0].mxu0 %v222
    %v258 = vpop.f32.mrb[0].mxu0
    %v259 = vadd.f32 %v193, %v258
    %v260 = vpop.f32.mrb[0].mxu0
    %v261 = vadd.f32 %v197, %v260
    %v262 = vpop.f32.mrb[0].mxu0
    %v263 = vpop.f32.mrb[0].mxu0
    %264 = vdwg.mxu0
    %v265 = vmax.f32 %v259, 0.0
    %v266 = vmax.f32 %v261, 0.0
    %v267 = vpack.c.bf16 %v265, %v265
    %v268 = vld [vmem:[%s3] sm:$0xff]
    %v269 = vld [vmem:[%s3 + $0x8] sm:$0xff]
    %v270 = vld [vmem:[%s3 + $0x10] sm:$0xff]
    %v271 = vld [vmem:[%s3 + $0x18] sm:$0xff]
    %v272 = vld [vmem:[%s3 + $0x20] sm:$0xff]
    %v273 = vld [vmem:[%s3 + $0x28] sm:$0xff]
    %v274 = vld [vmem:[%s3 + $0x30] sm:$0xff]
    %v275 = vld [vmem:[%s3 + $0x38] sm:$0xff]
    %v276 = vld [vmem:[%s3 + $0x40] sm:$0xff]
    %v277 = vld [vmem:[%s3 + $0x48] sm:$0xff]
    %v278 = vld [vmem:[%s3 + $0x50] sm:$0xff]
    %v279 = vld [vmem:[%s3 + $0x58] sm:$0xff]
    %v280 = vld [vmem:[%s3 + $0x60] sm:$0xff]
    %v281 = vld [vmem:[%s3 + $0x68] sm:$0xff]
    %v282 = vld [vmem:[%s3 + $0x70] sm:$0xff]
    %v283 = vld [vmem:[%s3 + $0x78] sm:$0xff]
    %v284 = vld [vmem:[#allocation6] sm:$0x3]
    %v286 = vlaneseq
    %v287 = vshrl.u32 %v286, 7
    %v288 = vsub.s32 0, %v287
    %v289 = vrot.slane %v284, %v288
    %v290 = vlaneseq
    %v291 = vshrl.u32 %v290, 7
    %v292 = vsub.s32 1, %v291
    %v293 = vrot.slane %v284, %v292
    %v312 = vunpack.c.l.b16 %v268
    %v313 = vunpack.c.h.b16 %v268
    %v314 = vunpack.c.l.b16 %v269
    %v315 = vunpack.c.h.b16 %v269
    %v316 = vunpack.c.l.b16 %v270
    %v317 = vunpack.c.h.b16 %v270
    %v318 = vunpack.c.l.b16 %v271
    %v319 = vunpack.c.h.b16 %v271
    %v320 = vunpack.c.l.b16 %v272
    %v321 = vunpack.c.h.b16 %v272
    %v322 = vunpack.c.l.b16 %v273
    %v323 = vunpack.c.h.b16 %v273
    %v324 = vunpack.c.l.b16 %v274
    %v325 = vunpack.c.h.b16 %v274
    %v326 = vunpack.c.l.b16 %v275
    %v327 = vunpack.c.h.b16 %v275
    %v328 = vunpack.c.l.b16 %v276
    %v329 = vunpack.c.h.b16 %v276
    %v330 = vunpack.c.l.b16 %v277
    %v331 = vunpack.c.h.b16 %v277
    %v332 = vunpack.c.l.b16 %v278
    %v333 = vunpack.c.h.b16 %v278
    %v334 = vunpack.c.l.b16 %v279
    %v335 = vunpack.c.h.b16 %v279
    %v336 = vunpack.c.l.b16 %v280
    %v337 = vunpack.c.h.b16 %v280
    %v338 = vunpack.c.l.b16 %v281
    %v339 = vunpack.c.h.b16 %v281
    %v340 = vunpack.c.l.b16 %v282
    %v341 = vunpack.c.h.b16 %v282
    %v342 = vunpack.c.l.b16 %v283
    %v343 = vunpack.c.h.b16 %v283
    %v344 = vpack.c.b16 %v314, %v312
    %v345 = vpack.c.b16 %v315, %v313
    %v346 = vpack.c.b16 %v318, %v316
    %v347 = vpack.c.b16 %v319, %v317
    %v348 = vpack.c.b16 %v322, %v320
    %v349 = vpack.c.b16 %v323, %v321
    %v350 = vpack.c.b16 %v326, %v324
    %v351 = vpack.c.b16 %v327, %v325
    %v352 = vpack.c.b16 %v330, %v328
    %v353 = vpack.c.b16 %v331, %v329
    %v354 = vpack.c.b16 %v334, %v332
    %v355 = vpack.c.b16 %v335, %v333
    %v356 = vpack.c.b16 %v338, %v336
    %v357 = vpack.c.b16 %v339, %v337
    %v358 = vpack.c.b16 %v342, %v340
    %v359 = vpack.c.b16 %v343, %v341
    %376 = vmatprep.subr.bf16.mxu0 %v345
    %377 = vmatpush1.bf16.msra.mxu0 %v344
    %378 = vmatprep.subr.bf16.mxu0 %v347
    %379 = vmatpush1.bf16.msra.mxu0 %v346
    %380 = vmatprep.subr.bf16.mxu0 %v349
    %381 = vmatpush1.bf16.msra.mxu0 %v348
    %382 = vmatprep.subr.bf16.mxu0 %v351
    %383 = vmatpush1.bf16.msra.mxu0 %v350
    %384 = vmatprep.subr.bf16.mxu0 %v353
    %385 = vmatpush1.bf16.msra.mxu0 %v352
    %386 = vmatprep.subr.bf16.mxu0 %v355
    %387 = vmatpush1.bf16.msra.mxu0 %v354
    %388 = vmatprep.subr.bf16.mxu0 %v357
    %389 = vmatpush1.bf16.msra.mxu0 %v356
    %390 = vmatprep.subr.bf16.mxu0 %v359
    %391 = vmatpush1.bf16.msra.mxu0 %v358
    %392 = vmatprep.subr.bf16.mxu0 0
    %393 = vmatpush1.bf16.msra.mxu0 0
    %394 = vmatprep.subr.bf16.mxu0 0
    %395 = vmatpush1.bf16.msra.mxu0 0
    %396 = vmatprep.subr.bf16.mxu0 0
    %397 = vmatpush1.bf16.msra.mxu0 0
    %398 = vmatprep.subr.bf16.mxu0 0
    %399 = vmatpush1.bf16.msra.mxu0 0
    %400 = vmatprep.subr.bf16.mxu0 0
    %401 = vmatpush1.bf16.msra.mxu0 0
    %402 = vmatprep.subr.bf16.mxu0 0
    %403 = vmatpush1.bf16.msra.mxu0 0
    %404 = vmatprep.subr.bf16.mxu0 0
    %405 = vmatpush1.bf16.msra.mxu0 0
    %406 = vmatprep.subr.bf16.mxu0 0
    %407 = vmatpush1.bf16.msra.mxu0 0
    %408 = vmatprep.mubr.bf16.mxu0 0
    %409 = vmatmul.mubr.bf16.gmra.mrb[0].mxu0 %v267
    %v410 = vpop.f32.mrb[0].mxu0
    %v411 = vadd.f32 %v289, %v410
    %v412 = vpop.f32.mrb[0].mxu0
    %v413 = vadd.f32 %v293, %v412
    %v414 = vpop.f32.mrb[0].mxu0
    %v415 = vpop.f32.mrb[0].mxu0
    %416 = vdwg.mxu0
    %v417 = vmul.f32 %v411, 0.01
    %v418 = vmul.f32 %v413, 0.01
    %v419 = vmax.f32 %v411, %v417
    %v420 = vmax.f32 %v413, %v418
    %v421 = vpack.c.bf16 %v419, %v419
    %v422 = vpack.c.bf16 %v420, %v420
    %v423 = vld [vmem:[#allocation7] sm:$0xf]
    %v424 = vld [vmem:[#allocation7 + $0x4] sm:$0xf]
    %v425 = vld [vmem:[#allocation7 + $0x8] sm:$0xf]
    %v426 = vld [vmem:[#allocation7 + $0xc] sm:$0xf]
    %v427 = vld [vmem:[#allocation7 + $0x10] sm:$0xf]
    %v428 = vld [vmem:[#allocation7 + $0x14] sm:$0xf]
    %v429 = vld [vmem:[#allocation7 + $0x18] sm:$0xf]
    %v430 = vld [vmem:[#allocation7 + $0x1c] sm:$0xf]
    %v431 = vld [vmem:[#allocation7 + $0x20] sm:$0xf]
    %v432 = vld [vmem:[#allocation7 + $0x24] sm:$0xf]
    %v433 = vld [vmem:[#allocation7 + $0x28] sm:$0xf]
    %v434 = vld [vmem:[#allocation7 + $0x2c] sm:$0xf]
    %v435 = vld [vmem:[#allocation7 + $0x30] sm:$0xf]
    %v436 = vld [vmem:[#allocation7 + $0x34] sm:$0xf]
    %v437 = vld [vmem:[#allocation7 + $0x38] sm:$0xf]
    %v438 = vld [vmem:[#allocation7 + $0x3c] sm:$0xf]
    %v439 = vld [vmem:[#allocation7 + $0x40] sm:$0xf]
    %v440 = vld [vmem:[#allocation7 + $0x44] sm:$0xf]
    %v441 = vld [vmem:[#allocation7 + $0x48] sm:$0xf]
    %v442 = vld [vmem:[#allocation7 + $0x4c] sm:$0xf]
    %v443 = vld [vmem:[#allocation7 + $0x50] sm:$0xf]
    %v444 = vld [vmem:[#allocation7 + $0x54] sm:$0xf]
    %v445 = vld [vmem:[#allocation7 + $0x58] sm:$0xf]
    %v446 = vld [vmem:[#allocation7 + $0x5c] sm:$0xf]
    %v447 = vld [vmem:[#allocation7 + $0x60] sm:$0xf]
    %v448 = vld [vmem:[#allocation7 + $0x64] sm:$0xf]
    %v449 = vld [vmem:[#allocation7 + $0x68] sm:$0xf]
    %v450 = vld [vmem:[#allocation7 + $0x6c] sm:$0xf]
    %v451 = vld [vmem:[#allocation7 + $0x70] sm:$0xf]
    %v452 = vld [vmem:[#allocation7 + $0x74] sm:$0xf]
    %v453 = vld [vmem:[#allocation7 + $0x78] sm:$0xf]
    %v454 = vld [vmem:[#allocation7 + $0x7c] sm:$0xf]
    %v455 = vld [vmem:[#allocation9] sm:$0x1]
    %v457 = vlaneseq
    %v458 = vshrl.u32 %v457, 7
    %v459 = vsub.s32 0, %v458
    %v460 = vrot.slane %v455, %v459
    %v494 = vunpack.c.l.b16 %v423
    %v495 = vunpack.c.l.b16 %v424
    %v496 = vunpack.c.l.b16 %v425
    %v497 = vunpack.c.l.b16 %v426
    %v498 = vunpack.c.l.b16 %v427
    %v499 = vunpack.c.l.b16 %v428
    %v500 = vunpack.c.l.b16 %v429
    %v501 = vunpack.c.l.b16 %v430
    %v502 = vunpack.c.l.b16 %v431
    %v503 = vunpack.c.l.b16 %v432
    %v504 = vunpack.c.l.b16 %v433
    %v505 = vunpack.c.l.b16 %v434
    %v506 = vunpack.c.l.b16 %v435
    %v507 = vunpack.c.l.b16 %v436
    %v508 = vunpack.c.l.b16 %v437
    %v509 = vunpack.c.l.b16 %v438
    %v510 = vunpack.c.l.b16 %v439
    %v511 = vunpack.c.l.b16 %v440
    %v512 = vunpack.c.l.b16 %v441
    %v513 = vunpack.c.l.b16 %v442
    %v514 = vunpack.c.l.b16 %v443
    %v515 = vunpack.c.l.b16 %v444
    %v516 = vunpack.c.l.b16 %v445
    %v517 = vunpack.c.l.b16 %v446
    %v518 = vunpack.c.l.b16 %v447
    %v519 = vunpack.c.l.b16 %v448
    %v520 = vunpack.c.l.b16 %v449
    %v521 = vunpack.c.l.b16 %v450
    %v522 = vunpack.c.l.b16 %v451
    %v523 = vunpack.c.l.b16 %v452
    %v524 = vunpack.c.l.b16 %v453
    %v525 = vunpack.c.l.b16 %v454
    %v526 = vpack.c.b16 %v495, %v494
    %v527 = vpack.c.b16 %v497, %v496
    %v528 = vpack.c.b16 %v499, %v498
    %v529 = vpack.c.b16 %v501, %v500
    %v530 = vpack.c.b16 %v503, %v502
    %v531 = vpack.c.b16 %v505, %v504
    %v532 = vpack.c.b16 %v507, %v506
    %v533 = vpack.c.b16 %v509, %v508
    %v534 = vpack.c.b16 %v511, %v510
    %v535 = vpack.c.b16 %v513, %v512
    %v536 = vpack.c.b16 %v515, %v514
    %v537 = vpack.c.b16 %v517, %v516
    %v538 = vpack.c.b16 %v519, %v518
    %v539 = vpack.c.b16 %v521, %v520
    %v540 = vpack.c.b16 %v523, %v522
    %v541 = vpack.c.b16 %v525, %v524
    %558 = vmatprep.subr.bf16.mxu0 0
    %559 = vmatpush1.bf16.msra.mxu0 %v526
    %560 = vmatprep.subr.bf16.mxu0 0
    %561 = vmatpush1.bf16.msra.mxu0 %v527
    %562 = vmatprep.subr.bf16.mxu0 0
    %563 = vmatpush1.bf16.msra.mxu0 %v528
    %564 = vmatprep.subr.bf16.mxu0 0
    %565 = vmatpush1.bf16.msra.mxu0 %v529
    %566 = vmatprep.subr.bf16.mxu0 0
    %567 = vmatpush1.bf16.msra.mxu0 %v530
    %568 = vmatprep.subr.bf16.mxu0 0
    %569 = vmatpush1.bf16.msra.mxu0 %v531
    %570 = vmatprep.subr.bf16.mxu0 0
    %571 = vmatpush1.bf16.msra.mxu0 %v532
    %572 = vmatprep.subr.bf16.mxu0 0
    %573 = vmatpush1.bf16.msra.mxu0 %v533
    %574 = vmatprep.subr.bf16.mxu0 0
    %575 = vmatpush1.bf16.msra.mxu0 %v534
    %576 = vmatprep.subr.bf16.mxu0 0
    %577 = vmatpush1.bf16.msra.mxu0 %v535
    %578 = vmatprep.subr.bf16.mxu0 0
    %579 = vmatpush1.bf16.msra.mxu0 %v536
    %580 = vmatprep.subr.bf16.mxu0 0
    %581 = vmatpush1.bf16.msra.mxu0 %v537
    %582 = vmatprep.subr.bf16.mxu0 0
    %583 = vmatpush1.bf16.msra.mxu0 %v538
    %584 = vmatprep.subr.bf16.mxu0 0
    %585 = vmatpush1.bf16.msra.mxu0 %v539
    %586 = vmatprep.subr.bf16.mxu0 0
    %587 = vmatpush1.bf16.msra.mxu0 %v540
    %588 = vmatprep.subr.bf16.mxu0 0
    %589 = vmatpush1.bf16.msra.mxu0 %v541
    %590 = vmatprep.mubr.bf16.mxu0 %v422
    %591 = vmatmul.mubr.bf16.gmra.mrb[0].mxu0 %v421
    %v592 = vpop.f32.mrb[0].mxu0
    %v593 = vadd.f32 %v460, %v592
    %v594 = vpop.f32.mrb[0].mxu0
    %v595 = vpop.f32.mrb[0].mxu0
    %v596 = vpop.f32.mrb[0].mxu0
    %597 = vdwg.mxu0
    %v598 = vmul.f32 %v593, 0.01
    %v599 = vmax.f32 %v593, %v598
    %v600 = vpack.c.bf16 %v599, %v599
    %v601 = vld [vmem:[%s7] sm:$0xf]
    %v602 = vld [vmem:[%s7 + $0x4] sm:$0xf]
    %v603 = vld [vmem:[%s7 + $0x8] sm:$0xf]
    %v604 = vld [vmem:[%s7 + $0xc] sm:$0xf]
    %v605 = vld [vmem:[%s7 + $0x10] sm:$0xf]
    %v606 = vld [vmem:[%s7 + $0x14] sm:$0xf]
    %v607 = vld [vmem:[%s7 + $0x18] sm:$0xf]
    %v608 = vld [vmem:[%s7 + $0x1c] sm:$0xf]
    %v609 = vld [vmem:[%s7 + $0x20] sm:$0xf]
    %v610 = vld [vmem:[%s7 + $0x24] sm:$0xf]
    %v611 = vld [vmem:[%s7 + $0x28] sm:$0xf]
    %v612 = vld [vmem:[%s7 + $0x2c] sm:$0xf]
    %v613 = vld [vmem:[%s7 + $0x30] sm:$0xf]
    %v614 = vld [vmem:[%s7 + $0x34] sm:$0xf]
    %v615 = vld [vmem:[%s7 + $0x38] sm:$0xf]
    %v616 = vld [vmem:[%s7 + $0x3c] sm:$0xf]
    %v617 = vld [vmem:[%s8] sm:$0x1]
    %v619 = vlaneseq
    %v620 = vshrl.u32 %v619, 7
    %v621 = vsub.s32 0, %v620
    %v622 = vrot.slane %v617, %v621
    %v640 = vunpack.c.l.b16 %v601
    %v641 = vunpack.c.l.b16 %v602
    %v642 = vunpack.c.l.b16 %v603
    %v643 = vunpack.c.l.b16 %v604
    %v644 = vunpack.c.l.b16 %v605
    %v645 = vunpack.c.l.b16 %v606
    %v646 = vunpack.c.l.b16 %v607
    %v647 = vunpack.c.l.b16 %v608
    %v648 = vunpack.c.l.b16 %v609
    %v649 = vunpack.c.l.b16 %v610
    %v650 = vunpack.c.l.b16 %v611
    %v651 = vunpack.c.l.b16 %v612
    %v652 = vunpack.c.l.b16 %v613
    %v653 = vunpack.c.l.b16 %v614
    %v654 = vunpack.c.l.b16 %v615
    %v655 = vunpack.c.l.b16 %v616
    %v656 = vpack.c.b16 %v641, %v640
    %v657 = vpack.c.b16 %v643, %v642
    %v658 = vpack.c.b16 %v645, %v644
    %v659 = vpack.c.b16 %v647, %v646
    %v660 = vpack.c.b16 %v649, %v648
    %v661 = vpack.c.b16 %v651, %v650
    %v662 = vpack.c.b16 %v653, %v652
    %v663 = vpack.c.b16 %v655, %v654
    %672 = vmatprep.subr.bf16.mxu0 0
    %673 = vmatpush1.bf16.msra.mxu0 %v656
    %674 = vmatprep.subr.bf16.mxu0 0
    %675 = vmatpush1.bf16.msra.mxu0 %v657
    %676 = vmatprep.subr.bf16.mxu0 0
    %677 = vmatpush1.bf16.msra.mxu0 %v658
    %678 = vmatprep.subr.bf16.mxu0 0
    %679 = vmatpush1.bf16.msra.mxu0 %v659
    %680 = vmatprep.subr.bf16.mxu0 0
    %681 = vmatpush1.bf16.msra.mxu0 %v660
    %682 = vmatprep.subr.bf16.mxu0 0
    %683 = vmatpush1.bf16.msra.mxu0 %v661
    %684 = vmatprep.subr.bf16.mxu0 0
    %685 = vmatpush1.bf16.msra.mxu0 %v662
    %686 = vmatprep.subr.bf16.mxu0 0
    %687 = vmatpush1.bf16.msra.mxu0 %v663
    %688 = vmatprep.subr.bf16.mxu0 0
    %689 = vmatpush1.bf16.msra.mxu0 0
    %690 = vmatprep.subr.bf16.mxu0 0
    %691 = vmatpush1.bf16.msra.mxu0 0
    %692 = vmatprep.subr.bf16.mxu0 0
    %693 = vmatpush1.bf16.msra.mxu0 0
    %694 = vmatprep.subr.bf16.mxu0 0
    %695 = vmatpush1.bf16.msra.mxu0 0
    %696 = vmatprep.subr.bf16.mxu0 0
    %697 = vmatpush1.bf16.msra.mxu0 0
    %698 = vmatprep.subr.bf16.mxu0 0
    %699 = vmatpush1.bf16.msra.mxu0 0
    %700 = vmatprep.subr.bf16.mxu0 0
    %701 = vmatpush1.bf16.msra.mxu0 0
    %702 = vmatprep.subr.bf16.mxu0 0
    %703 = vmatpush1.bf16.msra.mxu0 0
    %704 = vmatprep.mubr.bf16.mxu0 0
    %705 = vmatmul.mubr.bf16.gmra.mrb[0].mxu0 %v600
    %v706 = vpop.f32.mrb[0].mxu0
    %v707 = vadd.f32 %v622, %v706
    %v708 = vpop.f32.mrb[0].mxu0
    %v709 = vpop.f32.mrb[0].mxu0
    %v710 = vpop.f32.mrb[0].mxu0
    %711 = vdwg.mxu0
    %v712 = vsel %vm220, %v707, -inf
    %713 = vmax.xlane.f32.xlu0 %v712
    %v714 = vpop.xlane.xlu0 %713
    %v715 = vsub.f32 %v707, %v714
    %v716 = vmul.f32 %v715, 1.442695
    %v717 = vpow.pop %v716
    %v718 = vsel %vm220, %v717, 0.0
    %719 = vadd.xlane.f32.xlu0 %v718
    %v720 = vpop.xlane.xlu0 %719
    %v721 = vrcp.pop %v720
    %v722 = vmul.f32 %v721, 8.0
    %v723 = vmul.f32 %v717, %v722
    %v724 = vpack.c.bf16 %v266, %v266
    %v725 = vld [vmem:[%s9] sm:$0xf]
    %v726 = vld [vmem:[%s9 + $0x4] sm:$0xf]
    %v727 = vld [vmem:[%s9 + $0x8] sm:$0xf]
    %v728 = vld [vmem:[%s9 + $0xc] sm:$0xf]
    %v729 = vld [vmem:[%s9 + $0x10] sm:$0xf]
    %v730 = vld [vmem:[%s9 + $0x14] sm:$0xf]
    %v731 = vld [vmem:[%s9 + $0x18] sm:$0xf]
    %v732 = vld [vmem:[%s9 + $0x1c] sm:$0xf]
    %v733 = vld [vmem:[#allocation10] sm:$0x1]
    %v735 = vlaneseq
    %v736 = vshrl.u32 %v735, 7
    %v737 = vsub.s32 0, %v736
    %v738 = vrot.slane %v733, %v737
    %v748 = vunpack.c.l.b16 %v725
    %v749 = vunpack.c.l.b16 %v726
    %v750 = vunpack.c.l.b16 %v727
    %v751 = vunpack.c.l.b16 %v728
    %v752 = vunpack.c.l.b16 %v729
    %v753 = vunpack.c.l.b16 %v730
    %v754 = vunpack.c.l.b16 %v731
    %v755 = vunpack.c.l.b16 %v732
    %v756 = vpack.c.b16 %v749, %v748
    %v757 = vpack.c.b16 %v751, %v750
    %v758 = vpack.c.b16 %v753, %v752
    %v759 = vpack.c.b16 %v755, %v754
    %vm764 = vcmask 523264
    %v766 = vsel %vm764, %v724, 0
    %768 = vmatprep.subr.bf16.mxu0 0
    %769 = vmatpush1.bf16.msra.mxu0 %v756
    %770 = vmatprep.subr.bf16.mxu0 0
    %771 = vmatpush1.bf16.msra.mxu0 %v757
    %772 = vmatprep.subr.bf16.mxu0 0
    %773 = vmatpush1.bf16.msra.mxu0 %v758
    %774 = vmatprep.subr.bf16.mxu0 0
    %775 = vmatpush1.bf16.msra.mxu0 %v759
    %776 = vmatprep.subr.bf16.mxu0 0
    %777 = vmatpush1.bf16.msra.mxu0 0
    %778 = vmatprep.subr.bf16.mxu0 0
    %779 = vmatpush1.bf16.msra.mxu0 0
    %780 = vmatprep.subr.bf16.mxu0 0
    %781 = vmatpush1.bf16.msra.mxu0 0
    %782 = vmatprep.subr.bf16.mxu0 0
    %783 = vmatpush1.bf16.msra.mxu0 0
    %784 = vmatprep.subr.bf16.mxu0 0
    %785 = vmatpush1.bf16.msra.mxu0 0
    %786 = vmatprep.subr.bf16.mxu0 0
    %787 = vmatpush1.bf16.msra.mxu0 0
    %788 = vmatprep.subr.bf16.mxu0 0
    %789 = vmatpush1.bf16.msra.mxu0 0
    %790 = vmatprep.subr.bf16.mxu0 0
    %791 = vmatpush1.bf16.msra.mxu0 0
    %792 = vmatprep.subr.bf16.mxu0 0
    %793 = vmatpush1.bf16.msra.mxu0 0
    %794 = vmatprep.subr.bf16.mxu0 0
    %795 = vmatpush1.bf16.msra.mxu0 0
    %796 = vmatprep.subr.bf16.mxu0 0
    %797 = vmatpush1.bf16.msra.mxu0 0
    %798 = vmatprep.subr.bf16.mxu0 0
    %799 = vmatpush1.bf16.msra.mxu0 0
    %800 = vmatprep.mubr.bf16.mxu0 0
    %801 = vmatmul.mubr.bf16.gmra.mrb[0].mxu0 %v766
    %v802 = vpop.f32.mrb[0].mxu0
    %v803 = vadd.f32 %v738, %v802
    %v804 = vpop.f32.mrb[0].mxu0
    %v805 = vpop.f32.mrb[0].mxu0
    %v806 = vpop.f32.mrb[0].mxu0
    %807 = vdwg.mxu0
    %v808 = vsel %vm220, %v803, -inf
    %809 = vmax.xlane.f32.xlu0 %v808
    %v810 = vpop.xlane.xlu0 %809
    %v811 = vsub.f32 %v803, %v810
    %v812 = vmul.f32 %v811, 1.442695
    %v813 = vpow.pop %v812
    %v814 = vpack.c.bf16 %v813, %v813
    %v815 = vld [vmem:[%s11] sm:$0xf]
    %v816 = vld [vmem:[%s11 + $0x4] sm:$0xf]
    %v817 = vld [vmem:[%s11 + $0x8] sm:$0xf]
    %v818 = vld [vmem:[%s11 + $0xc] sm:$0xf]
    %v823 = vunpack.c.l.b16 %v815
    %v824 = vunpack.c.l.b16 %v816
    %v825 = vunpack.c.l.b16 %v817
    %v826 = vunpack.c.l.b16 %v818
    %v827 = vpack.c.b16 %v824, %v823
    %v828 = vpack.c.b16 %v826, %v825
    %v832 = vsel %vm220, %v814, 0
    %834 = vmatprep.subr.bf16.mxu0 0
    %835 = vmatpush1.bf16.msra.mxu0 %v827
    %836 = vmatprep.subr.bf16.mxu0 0
    %837 = vmatpush1.bf16.msra.mxu0 %v828
    %838 = vmatprep.subr.bf16.mxu0 0
    %839 = vmatpush1.bf16.msra.mxu0 0
    %840 = vmatprep.subr.bf16.mxu0 0
    %841 = vmatpush1.bf16.msra.mxu0 0
    %842 = vmatprep.subr.bf16.mxu0 0
    %843 = vmatpush1.bf16.msra.mxu0 0
    %844 = vmatprep.subr.bf16.mxu0 0
    %845 = vmatpush1.bf16.msra.mxu0 0
    %846 = vmatprep.subr.bf16.mxu0 0
    %847 = vmatpush1.bf16.msra.mxu0 0
    %848 = vmatprep.subr.bf16.mxu0 0
    %849 = vmatpush1.bf16.msra.mxu0 0
    %850 = vmatprep.subr.bf16.mxu0 0
    %851 = vmatpush1.bf16.msra.mxu0 0
    %852 = vmatprep.subr.bf16.mxu0 0
    %853 = vmatpush1.bf16.msra.mxu0 0
    %854 = vmatprep.subr.bf16.mxu0 0
    %855 = vmatpush1.bf16.msra.mxu0 0
    %856 = vmatprep.subr.bf16.mxu0 0
    %857 = vmatpush1.bf16.msra.mxu0 0
    %858 = vmatprep.subr.bf16.mxu0 0
    %859 = vmatpush1.bf16.msra.mxu0 0
    %860 = vmatprep.subr.bf16.mxu0 0
    %861 = vmatpush1.bf16.msra.mxu0 0
    %862 = vmatprep.subr.bf16.mxu0 0
    %863 = vmatpush1.bf16.msra.mxu0 0
    %864 = vmatprep.subr.bf16.mxu0 0
    %865 = vmatpush1.bf16.msra.mxu0 0
    %866 = vmatprep.mubr.bf16.mxu0 0
    %867 = vmatmul.mubr.bf16.gmra.mrb[0].mxu0 %v832
    %v868 = vpop.f32.mrb[0].mxu0
    %v869 = vadd.f32 0.0, %v868
    %v870 = vpop.f32.mrb[0].mxu0
    %v871 = vpop.f32.mrb[0].mxu0
    %v872 = vpop.f32.mrb[0].mxu0
    %873 = vdwg.mxu0
    %v874 = vmul.f32 %v813, %v723
    %v875 = vrcp.pop %v869
    %v876 = vmul.f32 %v874, %v875
    %v877 = vpack.c.bf16 %v876, %v876
    %v878 = vld [vmem:[#allocation12] sm:$0xf]
    %v879 = vld [vmem:[#allocation12 + $0x4] sm:$0xf]
    %v880 = vld [vmem:[#allocation12 + $0x8] sm:$0xf]
    %v881 = vld [vmem:[#allocation12 + $0xc] sm:$0xf]
    %v882 = vld [vmem:[#allocation13] sm:$0x1]
    %v884 = vlaneseq
    %v885 = vshrl.u32 %v884, 7
    %v886 = vsub.s32 0, %v885
    %v887 = vrot.slane %v882, %v886
    %v893 = vunpack.c.l.b16 %v878
    %v894 = vunpack.c.l.b16 %v879
    %v895 = vunpack.c.l.b16 %v880
    %v896 = vunpack.c.l.b16 %v881
    %v897 = vpack.c.b16 %v894, %v893
    %v898 = vpack.c.b16 %v896, %v895
    %v902 = vsel %vm220, %v877, 0
    %904 = vmatprep.subr.bf16.mxu0 0
    %905 = vmatpush1.bf16.msra.mxu0 %v897
    %906 = vmatprep.subr.bf16.mxu0 0
    %907 = vmatpush1.bf16.msra.mxu0 %v898
    %908 = vmatprep.subr.bf16.mxu0 0
    %909 = vmatpush1.bf16.msra.mxu0 0
    %910 = vmatprep.subr.bf16.mxu0 0
    %911 = vmatpush1.bf16.msra.mxu0 0
    %912 = vmatprep.subr.bf16.mxu0 0
    %913 = vmatpush1.bf16.msra.mxu0 0
    %914 = vmatprep.subr.bf16.mxu0 0
    %915 = vmatpush1.bf16.msra.mxu0 0
    %916 = vmatprep.subr.bf16.mxu0 0
    %917 = vmatpush1.bf16.msra.mxu0 0
    %918 = vmatprep.subr.bf16.mxu0 0
    %919 = vmatpush1.bf16.msra.mxu0 0
    %920 = vmatprep.subr.bf16.mxu0 0
    %921 = vmatpush1.bf16.msra.mxu0 0
    %922 = vmatprep.subr.bf16.mxu0 0
    %923 = vmatpush1.bf16.msra.mxu0 0
    %924 = vmatprep.subr.bf16.mxu0 0
    %925 = vmatpush1.bf16.msra.mxu0 0
    %926 = vmatprep.subr.bf16.mxu0 0
    %927 = vmatpush1.bf16.msra.mxu0 0
    %928 = vmatprep.subr.bf16.mxu0 0
    %929 = vmatpush1.bf16.msra.mxu0 0
    %930 = vmatprep.subr.bf16.mxu0 0
    %931 = vmatpush1.bf16.msra.mxu0 0
    %932 = vmatprep.subr.bf16.mxu0 0
    %933 = vmatpush1.bf16.msra.mxu0 0
    %934 = vmatprep.subr.bf16.mxu0 0
    %935 = vmatpush1.bf16.msra.mxu0 0
    %936 = vmatprep.mubr.bf16.mxu0 0
    %937 = vmatmul.mubr.bf16.gmra.mrb[0].mxu0 %v902
    %v938 = vpop.f32.mrb[0].mxu0
    %v939 = vadd.f32 %v887, %v938
    %v940 = vpop.f32.mrb[0].mxu0
    %v941 = vpop.f32.mrb[0].mxu0
    %v942 = vpop.f32.mrb[0].mxu0
    %943 = vdwg.mxu0
    %v944 = vmax.f32 %v939, 0.0
    %v945 = vpack.c.bf16 %v944, %v944
    %v946 = vld [vmem:[#allocation15] sm:$0xf]
    %v947 = vld [vmem:[#allocation15 + $0x4] sm:$0xf]
    %v948 = vld [vmem:[#allocation15 + $0x8] sm:$0xf]
    %v949 = vld [vmem:[#allocation15 + $0xc] sm:$0xf]
    %v950 = vld [vmem:[%s15] sm:$0x1]
    %v952 = vlaneseq
    %v953 = vshrl.u32 %v952, 7
    %v954 = vsub.s32 0, %v953
    %v955 = vrot.slane %v950, %v954
    %v961 = vunpack.c.l.b16 %v946
    %v962 = vunpack.c.l.b16 %v947
    %v963 = vunpack.c.l.b16 %v948
    %v964 = vunpack.c.l.b16 %v949
    %v965 = vpack.c.b16 %v962, %v961
    %v966 = vpack.c.b16 %v964, %v963
    %v970 = vsel %vm220, %v945, 0
    %972 = vmatprep.subr.bf16.mxu0 0
    %973 = vmatpush1.bf16.msra.mxu0 %v965
    %974 = vmatprep.subr.bf16.mxu0 0
    %975 = vmatpush1.bf16.msra.mxu0 %v966
    %976 = vmatprep.subr.bf16.mxu0 0
    %977 = vmatpush1.bf16.msra.mxu0 0
    %978 = vmatprep.subr.bf16.mxu0 0
    %979 = vmatpush1.bf16.msra.mxu0 0
    %980 = vmatprep.subr.bf16.mxu0 0
    %981 = vmatpush1.bf16.msra.mxu0 0
    %982 = vmatprep.subr.bf16.mxu0 0
    %983 = vmatpush1.bf16.msra.mxu0 0
    %984 = vmatprep.subr.bf16.mxu0 0
    %985 = vmatpush1.bf16.msra.mxu0 0
    %986 = vmatprep.subr.bf16.mxu0 0
    %987 = vmatpush1.bf16.msra.mxu0 0
    %988 = vmatprep.subr.bf16.mxu0 0
    %989 = vmatpush1.bf16.msra.mxu0 0
    %990 = vmatprep.subr.bf16.mxu0 0
    %991 = vmatpush1.bf16.msra.mxu0 0
    %992 = vmatprep.subr.bf16.mxu0 0
    %993 = vmatpush1.bf16.msra.mxu0 0
    %994 = vmatprep.subr.bf16.mxu0 0
    %995 = vmatpush1.bf16.msra.mxu0 0
    %996 = vmatprep.subr.bf16.mxu0 0
    %997 = vmatpush1.bf16.msra.mxu0 0
    %998 = vmatprep.subr.bf16.mxu0 0
    %999 = vmatpush1.bf16.msra.mxu0 0
    %1000 = vmatprep.subr.bf16.mxu0 0
    %1001 = vmatpush1.bf16.msra.mxu0 0
    %1002 = vmatprep.subr.bf16.mxu0 0
    %1003 = vmatpush1.bf16.msra.mxu0 0
    %1004 = vmatprep.mubr.bf16.mxu0 0
    %1005 = vmatmul.mubr.bf16.gmra.mrb[0].mxu0 %v970
    %v1006 = vpop.f32.mrb[0].mxu0
    %v1007 = vadd.f32 %v955, %v1006
    %v1008 = vpop.f32.mrb[0].mxu0
    %v1009 = vpop.f32.mrb[0].mxu0
    %v1010 = vpop.f32.mrb[0].mxu0
    %1011 = vdwg.mxu0
    %v1012 = vmax.f32 %v1007, 0.0
    %v1013 = vpack.c.bf16 %v1012, %v1012
    %v1014 = vld [vmem:[%s16] sm:$0xf]
    %v1015 = vld [vmem:[%s16 + $0x4] sm:$0xf]
    %v1016 = vld [vmem:[%s16 + $0x8] sm:$0xf]
    %v1017 = vld [vmem:[%s16 + $0xc] sm:$0xf]
    %v1018 = vld [vmem:[%s17] sm:$0x1]
    %v1020 = vlaneseq
    %v1021 = vshrl.u32 %v1020, 7
    %v1022 = vsub.s32 0, %v1021
    %v1023 = vrot.slane %v1018, %v1022
    %v1029 = vunpack.c.l.b16 %v1014
    %v1030 = vunpack.c.l.b16 %v1015
    %v1031 = vunpack.c.l.b16 %v1016
    %v1032 = vunpack.c.l.b16 %v1017
    %v1033 = vpack.c.b16 %v1030, %v1029
    %v1034 = vpack.c.b16 %v1032, %v1031
    %v1038 = vsel %vm220, %v1013, 0
    %1040 = vmatprep.subr.bf16.mxu0 0
    %1041 = vmatpush1.bf16.msra.mxu0 %v1033
    %1042 = vmatprep.subr.bf16.mxu0 0
    %1043 = vmatpush1.bf16.msra.mxu0 %v1034
    %1044 = vmatprep.subr.bf16.mxu0 0
    %1045 = vmatpush1.bf16.msra.mxu0 0
    %1046 = vmatprep.subr.bf16.mxu0 0
    %1047 = vmatpush1.bf16.msra.mxu0 0
    %1048 = vmatprep.subr.bf16.mxu0 0
    %1049 = vmatpush1.bf16.msra.mxu0 0
    %1050 = vmatprep.subr.bf16.mxu0 0
    %1051 = vmatpush1.bf16.msra.mxu0 0
    %1052 = vmatprep.subr.bf16.mxu0 0
    %1053 = vmatpush1.bf16.msra.mxu0 0
    %1054 = vmatprep.subr.bf16.mxu0 0
    %1055 = vmatpush1.bf16.msra.mxu0 0
    %1056 = vmatprep.subr.bf16.mxu0 0
    %1057 = vmatpush1.bf16.msra.mxu0 0
    %1058 = vmatprep.subr.bf16.mxu0 0
    %1059 = vmatpush1.bf16.msra.mxu0 0
    %1060 = vmatprep.subr.bf16.mxu0 0
    %1061 = vmatpush1.bf16.msra.mxu0 0
    %1062 = vmatprep.subr.bf16.mxu0 0
    %1063 = vmatpush1.bf16.msra.mxu0 0
    %1064 = vmatprep.subr.bf16.mxu0 0
    %1065 = vmatpush1.bf16.msra.mxu0 0
    %1066 = vmatprep.subr.bf16.mxu0 0
    %1067 = vmatpush1.bf16.msra.mxu0 0
    %1068 = vmatprep.subr.bf16.mxu0 0
    %1069 = vmatpush1.bf16.msra.mxu0 0
    %1070 = vmatprep.subr.bf16.mxu0 0
    %1071 = vmatpush1.bf16.msra.mxu0 0
    %1072 = vmatprep.mubr.bf16.mxu0 0
    %1073 = vmatmul.mubr.bf16.gmra.mrb[0].mxu0 %v1038
    %v1074 = vpop.f32.mrb[0].mxu0
    %v1075 = vadd.f32 %v1023, %v1074
    %v1076 = vpop.f32.mrb[0].mxu0
    %v1077 = vpop.f32.mrb[0].mxu0
    %v1078 = vpop.f32.mrb[0].mxu0
    %1079 = vdwg.mxu0
    %v1080 = vmax.f32 %v1075, 0.0
    %v1081 = vpack.c.bf16 %v1080, %v1080
    %v1082 = vld [vmem:[%s18] sm:$0xf]
    %v1083 = vld [vmem:[%s18 + $0x4] sm:$0xf]
    %v1084 = vld [vmem:[%s19] sm:$0x1]
    %v1086 = vlaneseq
    %v1087 = vshrl.u32 %v1086, 7
    %v1088 = vsub.s32 0, %v1087
    %v1089 = vrot.slane %v1084, %v1088
    %v1093 = vunpack.c.l.b16 %v1082
    %v1094 = vunpack.c.l.b16 %v1083
    %v1095 = vpack.c.b16 %v1094, %v1093
    %vm1097 = vcmask 130048
    %v1099 = vsel %vm1097, %v1081, 0
    %1101 = vmatprep.subr.bf16.mxu0 0
    %1102 = vmatpush1.bf16.msra.mxu0 %v1095
    %1103 = vmatprep.subr.bf16.mxu0 0
    %1104 = vmatpush1.bf16.msra.mxu0 0
    %1105 = vmatprep.subr.bf16.mxu0 0
    %1106 = vmatpush1.bf16.msra.mxu0 0
    %1107 = vmatprep.subr.bf16.mxu0 0
    %1108 = vmatpush1.bf16.msra.mxu0 0
    %1109 = vmatprep.subr.bf16.mxu0 0
    %1110 = vmatpush1.bf16.msra.mxu0 0
    %1111 = vmatprep.subr.bf16.mxu0 0
    %1112 = vmatpush1.bf16.msra.mxu0 0
    %1113 = vmatprep.subr.bf16.mxu0 0
    %1114 = vmatpush1.bf16.msra.mxu0 0
    %1115 = vmatprep.subr.bf16.mxu0 0
    %1116 = vmatpush1.bf16.msra.mxu0 0
    %1117 = vmatprep.subr.bf16.mxu0 0
    %1118 = vmatpush1.bf16.msra.mxu0 0
    %1119 = vmatprep.subr.bf16.mxu0 0
    %1120 = vmatpush1.bf16.msra.mxu0 0
    %1121 = vmatprep.subr.bf16.mxu0 0
    %1122 = vmatpush1.bf16.msra.mxu0 0
    %1123 = vmatprep.subr.bf16.mxu0 0
    %1124 = vmatpush1.bf16.msra.mxu0 0
    %1125 = vmatprep.subr.bf16.mxu0 0
    %1126 = vmatpush1.bf16.msra.mxu0 0
    %1127 = vmatprep.subr.bf16.mxu0 0
    %1128 = vmatpush1.bf16.msra.mxu0 0
    %1129 = vmatprep.subr.bf16.mxu0 0
    %1130 = vmatpush1.bf16.msra.mxu0 0
    %1131 = vmatprep.subr.bf16.mxu0 0
    %1132 = vmatpush1.bf16.msra.mxu0 0
    %1133 = vmatprep.mubr.bf16.mxu0 0
    %1134 = vmatmul.mubr.bf16.gmra.mrb[0].mxu0 %v1099
    %v1135 = vpop.f32.mrb[0].mxu0
    %v1136 = vadd.f32 %v1089, %v1135
    %v1137 = vpop.f32.mrb[0].mxu0
    %v1138 = vpop.f32.mrb[0].mxu0
    %v1139 = vpop.f32.mrb[0].mxu0
    %1140 = vdwg.mxu0
    %v1141 = vmax.f32 %v1136, 0.0
    %v1142 = vpack.c.bf16 %v1141, %v1141
    %v1143 = vld [vmem:[%s20] sm:$0xf]
    %v1144 = vld [vmem:[%s21] sm:$0x1]
    %v1146 = vlaneseq
    %v1147 = vshrl.u32 %v1146, 7
    %v1148 = vsub.s32 0, %v1147
    %v1149 = vrot.slane %v1144, %v1148
    %vm1151 = vcmask 64512
    %v1153 = vsel %vm1151, %v1142, 0
    %vm1155 = vcmask 1043456
    %v1157 = vsel %vm1155, %v1143, 0
    %1159 = vmatprep.subr.bf16.mxu0 0
    %1160 = vmatpush1.bf16.msra.mxu0 %v1157
    %1161 = vmatprep.subr.bf16.mxu0 0
    %1162 = vmatpush1.bf16.msra.mxu0 0
    %1163 = vmatprep.subr.bf16.mxu0 0
    %1164 = vmatpush1.bf16.msra.mxu0 0
    %1165 = vmatprep.subr.bf16.mxu0 0
    %1166 = vmatpush1.bf16.msra.mxu0 0
    %1167 = vmatprep.subr.bf16.mxu0 0
    %1168 = vmatpush1.bf16.msra.mxu0 0
    %1169 = vmatprep.subr.bf16.mxu0 0
    %1170 = vmatpush1.bf16.msra.mxu0 0
    %1171 = vmatprep.subr.bf16.mxu0 0
    %1172 = vmatpush1.bf16.msra.mxu0 0
    %1173 = vmatprep.subr.bf16.mxu0 0
    %1174 = vmatpush1.bf16.msra.mxu0 0
    %1175 = vmatprep.subr.bf16.mxu0 0
    %1176 = vmatpush1.bf16.msra.mxu0 0
    %1177 = vmatprep.subr.bf16.mxu0 0
    %1178 = vmatpush1.bf16.msra.mxu0 0
    %1179 = vmatprep.subr.bf16.mxu0 0
    %1180 = vmatpush1.bf16.msra.mxu0 0
    %1181 = vmatprep.subr.bf16.mxu0 0
    %1182 = vmatpush1.bf16.msra.mxu0 0
    %1183 = vmatprep.subr.bf16.mxu0 0
    %1184 = vmatpush1.bf16.msra.mxu0 0
    %1185 = vmatprep.subr.bf16.mxu0 0
    %1186 = vmatpush1.bf16.msra.mxu0 0
    %1187 = vmatprep.subr.bf16.mxu0 0
    %1188 = vmatpush1.bf16.msra.mxu0 0
    %1189 = vmatprep.subr.bf16.mxu0 0
    %1190 = vmatpush1.bf16.msra.mxu0 0
    %1191 = vmatprep.mubr.bf16.mxu0 0
    %1192 = vmatmul.mubr.bf16.gmra.mrb[0].mxu0 %v1153
    %v1193 = vpop.f32.mrb[0].mxu0
    %v1194 = vadd.f32 %v1149, %v1193
    %v1195 = vpop.f32.mrb[0].mxu0
    %v1196 = vpop.f32.mrb[0].mxu0
    %v1197 = vpop.f32.mrb[0].mxu0
    %1198 = vdwg.mxu0
    %v1199 = vsub.f32 0.0, %v1194
    %v1200 = vmul.f32 %v1199, 1.442695
    %v1201 = vpow.pop %v1200
    %v1202 = vadd.f32 %v1201, 1.0
    %v1203 = vrcp.pop %v1202
    %1205 = vrot.lane.b32.xlu0 %v1203, 4
    %v1206 = vpop.permute.xlu0 %1205
    %vm1208 = vcmask 31744
    %v1209 = vsel %vm1208, %v1194, %v1206
    %1210 = vst.msk [vmem:[%s22] sm:$0xff] %vm1151, %v1209
    // Predicated region
    $region126: #{m3tn_forward.1} parent=1 // pred_check
      _
    $region127: #{m3tn_forward.1} parent=1 // pred_check_branch
      %1212 = sbr.rel (0) target = $region129
    $region128: #{m3tn_forward.1} parent=1 // pred_region
      _
    $region129: #{m3tn_forward.1} parent=1 // pred_fallthru
      _
    // Predicated region
    $region130: #{m3tn_forward.1} parent=1 // pred_check
      _
    $region131: #{m3tn_forward.1} parent=1 // pred_check_branch
      %1214 = sbr.rel (0) target = $region133
    $region132: #{m3tn_forward.1} parent=1 // pred_region
      _
    $region133: #{m3tn_forward.1} parent=1 // pred_fallthru
      _
    %1215 = vsyncpa [#allocation3], 1
    %1216 = vsyncpa [#allocation5], 1
    %1217 = vsyncpa [#allocation8], 1
    %1218 = vsyncpa [#allocation11], 1
    %1219 = vsyncpa [#allocation14], 1

</llo_original>
